<compile_context>
chip_gen: v7x
topology: tpu7x:2x2x1
jax: 0.10.0
libtpu: 0.0.40
codegen_flags: <defaults>
</compile_context>

<pallas_src>
import math

import jax
import jax.numpy as jnp
from jax.experimental import pallas as pl
from jax.experimental.pallas import tpu as pltpu


def kernel_size(in_channel):
    """Compute kernel size for one dimension convolution in eca-net."""
    k = int((math.log2(in_channel) + 1) // 2)
    if k % 2 == 0:
        return k + 1
    return k


def _make_tfam_kernel(C, H, W, K):
    HW = H * W
    P1 = K // 2          # conv1d zero padding
    S = 3 * W + 3        # max |dy*W + dx| shift of the 7x7 conv in flat space

    def kernel(t1_ref, t2_ref, wcd_ref, wsd_ref, xm_ref, bias_ref,
               out_ref, ch_ref, sp_ref):
        bcd = bias_ref[0]                       # channel-conv bias difference
        bsd = bias_ref[1]                       # spatial-conv bias difference

        wcd = wcd_ref[...]                      # (K, 4)  channel weight diff
        wsd = wsd_ref[...]                      # (4, 49) spatial weight diff

        t1 = t1_ref[...].astype(jnp.float32)    # (C, HW), lane dense
        t2 = t2_ref[...].astype(jnp.float32)

        # ---------------- channel attention (eca-style 1-D conv, diff form) --
        chan_pool = jnp.concatenate(
            [jnp.mean(t1, axis=1, keepdims=True),
             jnp.max(t1, axis=1, keepdims=True),
             jnp.mean(t2, axis=1, keepdims=True),
             jnp.max(t2, axis=1, keepdims=True)], axis=1)        # (C, 4)

        if P1 > 0:
            zc = jnp.zeros((P1, 4), jnp.float32)
            ch_ref[...] = jnp.concatenate([zc, chan_pool, zc], axis=0)
        else:
            ch_ref[...] = chan_pool

        cacc = jnp.zeros((C, 4), jnp.float32)
        for j in range(K):
            cacc = cacc + wcd[j:j + 1, :] * ch_ref[j:j + C, :]
        ca_diff = jnp.sum(cacc, axis=1, keepdims=True) + bcd     # (C, 1)
        # softmax over 2 == sigmoid of the difference
        ch_att1 = 1.0 / (1.0 + jnp.exp(-ca_diff))                # (C, 1)

        # ---------------- spatial attention (7x7 conv in flat space, diff) ---
        sp_pool = jnp.concatenate(
            [jnp.mean(t1, axis=0, keepdims=True),
             jnp.max(t1, axis=0, keepdims=True),
             jnp.mean(t2, axis=0, keepdims=True),
             jnp.max(t2, axis=0, keepdims=True)], axis=0)        # (4, HW)

        zs = jnp.zeros((4, S), jnp.float32)
        sp_ref[...] = jnp.concatenate([zs, sp_pool, zs], axis=1)  # (4, HW+2S)

        acc = jnp.zeros((4, HW), jnp.float32)
        for dx in range(7):
            acc_dx = jnp.zeros((4, HW), jnp.float32)
            for dy in range(7):
                tap = dy * 7 + dx
                shift = (dy - 3) * W + (dx - 3)
                win = sp_ref[:, S + shift:S + shift + HW]         # (4, HW)
                acc_dx = acc_dx + wsd[:, tap:tap + 1] * win
            # row-wrap mask applied once per dx (factored out of the dy loop)
            acc = acc + acc_dx * xm_ref[dx:dx + 1, :]
        sa_diff = jnp.sum(acc, axis=0, keepdims=True) + bsd       # (1, HW)
        sp_att1 = 1.0 / (1.0 + jnp.exp(-sa_diff))                 # (1, HW)

        # ---------------- fused combine --------------------------------------
        # out = t1*(1+c1+s1) + t2*(1+(1-c1)+(1-s1))
        #     = t1 + 3*t2 + (c1 + s1) * (t1 - t2)
        att = ch_att1 + sp_att1                                   # (C, HW)
        out_ref[...] = (t1 + 3.0 * t2 + att * (t1 - t2)).astype(out_ref.dtype)

    return kernel


def tfam_pallas(t1, t2, params):
    """TFAM forward pass with a single Pallas TPU kernel.

    params = (wc1 (4,K), bc1 (1,), wc2 (4,K), bc2 (1,),
              ws1 (4,7,7), bs1 (1,), ws2 (4,7,7), bs2 (1,))
    """
    B, C, H, W = t1.shape
    K = kernel_size(C)
    P1 = K // 2
    HW = H * W
    S = 3 * W + 3
    wc1, bc1, wc2, bc2, ws1, bs1, ws2, bs2 = params

    # Weight/bias DIFFERENCES (softmax over two logits == sigmoid(diff)), in
    # small lane-friendly layouts.
    wcd_t = jnp.transpose(wc1 - wc2).astype(jnp.float32)        # (K, 4)
    wsd_r = (ws1 - ws2).reshape(4, 49).astype(jnp.float32)      # (4, 49), tap = dy*7+dx
    biases = jnp.concatenate([bc1 - bc2, bs1 - bs2]).astype(jnp.float32)  # (2,)

    # 7 horizontal-offset validity masks (row-wrap masking for the flattened
    # 7x7 conv); row d corresponds to offset ox = d - 3.
    x = jnp.arange(HW, dtype=jnp.int32) % W
    xmask = jnp.stack(
        [(((x + ox) >= 0) & ((x + ox) < W)).astype(jnp.float32)
         for ox in range(-3, 4)], axis=0)                       # (7, HW)

    # Lane-dense views of the feature maps (contiguous, free reshape in HBM).
    t1f = t1.reshape(B, C, HW)
    t2f = t2.reshape(B, C, HW)

    # VMEM budget: 2 inputs + 1 output, double-buffered, plus f32 compute
    # temporaries, constants and scratch.  Clamp to 48 MiB so it is safe on
    # v7x (64 MiB physical VMEM) as well as v5e/v6e (128 MiB).
    itemsize = jnp.dtype(t1.dtype).itemsize
    feat_bytes = C * HW * itemsize
    need = (6 * feat_bytes + 8 * C * HW * 4
            + 2 * 4 * (K * 4 + 4 * 49 + 7 * HW)
            + 4 * ((C + 2 * P1) * 4 + 4 * (HW + 2 * S))
            + (1 << 20))
    vmem_limit = int(min(max(2 * need, 8 << 20), 48 << 20))

    kernel = _make_tfam_kernel(C, H, W, K)
    feat_spec = pl.BlockSpec((None, C, HW), lambda b: (b, 0, 0))
    const2d = lambda b: (0, 0)

    out_flat = pl.pallas_call(
        kernel,
        out_shape=jax.ShapeDtypeStruct((B, C, HW), t1.dtype),
        grid_spec=pltpu.PrefetchScalarGridSpec(
            num_scalar_prefetch=0,
            grid=(B,),
            in_specs=[
                feat_spec,                                     # t1 (B, C, HW)
                feat_spec,                                     # t2 (B, C, HW)
                pl.BlockSpec((K, 4), const2d),                 # channel weight diff
                pl.BlockSpec((4, 49), const2d),                # spatial weight diff
                pl.BlockSpec((7, HW), const2d),                # x-wrap masks
                pl.BlockSpec(memory_space=pltpu.MemorySpace.SMEM),  # bias diffs (2,)
            ],
            out_specs=feat_spec,
            scratch_shapes=[
                pltpu.VMEM((C + 2 * P1, 4), jnp.float32),      # padded channel pool
                pltpu.VMEM((4, HW + 2 * S), jnp.float32),      # padded flat spatial pool
            ],
        ),
        compiler_params=pltpu.CompilerParams(
            dimension_semantics=("parallel",),
            vmem_limit_bytes=vmem_limit,
        ),
    )(t1f, t2f, wcd_t, wsd_r, xmask, biases)

    return out_flat.reshape(B, C, H, W)


# ---------------------------------------------------------------------------
# Pure-JAX reference (mirrors the PyTorch forward exactly) for verification.
# ---------------------------------------------------------------------------
def tfam_reference(t1, t2, full_params, K):
    wc1, bc1, wc2, bc2, ws1, bs1, ws2, bs2 = full_params

    t1_avg = jnp.mean(t1, axis=(2, 3), keepdims=True)
    t1_max = jnp.max(t1, axis=(2, 3), keepdims=True)
    t2_avg = jnp.mean(t2, axis=(2, 3), keepdims=True)
    t2_max = jnp.max(t2, axis=(2, 3), keepdims=True)
    channel_pool = jnp.concatenate([t1_avg, t1_max, t2_avg, t2_max], axis=2)  # (B,C,4,1)
    channel_pool = jnp.transpose(channel_pool[..., 0], (0, 2, 1))             # (B,4,C)

    def conv1d(x, w, b):
        out = jax.lax.conv_general_dilated(
            x, w, window_strides=(1,), padding=[(K // 2, K // 2)],
            dimension_numbers=("NCH", "OIH", "NCH"))
        return out + b[None, :, None]

    a1 = conv1d(channel_pool, wc1, bc1)
    a2 = conv1d(channel_pool, wc2, bc2)
    ch_stack = jax.nn.softmax(jnp.stack([a1, a2], axis=0), axis=0)  # (2,B,1,C)
    ch_stack = jnp.swapaxes(ch_stack, -1, -2)[..., None]            # (2,B,C,1,1)

    sp_pool = jnp.concatenate(
        [jnp.mean(t1, axis=1, keepdims=True), jnp.max(t1, axis=1, keepdims=True),
         jnp.mean(t2, axis=1, keepdims=True), jnp.max(t2, axis=1, keepdims=True)],
        axis=1)                                                     # (B,4,H,W)

    def conv2d(x, w, b):
        out = jax.lax.conv_general_dilated(
            x, w, window_strides=(1, 1), padding=[(3, 3), (3, 3)],
            dimension_numbers=("NCHW", "OIHW", "NCHW"))
        return out + b[None, :, None, None]

    s1 = conv2d(sp_pool, ws1, bs1)
    s2 = conv2d(sp_pool, ws2, bs2)
    sp_stack = jax.nn.softmax(jnp.stack([s1, s2], axis=0), axis=0)  # (2,B,1,H,W)

    att = ch_stack + sp_stack + 1.0                                 # (2,B,C,H,W)
    return att[0] * t1 + att[1] * t2


if __name__ == "__main__":
    B, C, H, W = 2, 32, 16, 16
    K = kernel_size(C)   # = 3 for C=32

    key = jax.random.PRNGKey(0)
    k_t1, k_t2, k0, k1, k2, k3, k4, k5, k6, k7 = jax.random.split(key, 10)

    t1 = jax.random.normal(k_t1, (B, C, H, W), dtype=jnp.float32)
    t2 = jax.random.normal(k_t2, (B, C, H, W), dtype=jnp.float32)

    # Deterministic parameter init (same shapes as the nn.Module's layers).
    wc1_full = jax.random.uniform(k0, (1, 4, K), jnp.float32, -0.3, 0.3)
    bc1 = jax.random.uniform(k1, (1,), jnp.float32, -0.3, 0.3)
    wc2_full = jax.random.uniform(k2, (1, 4, K), jnp.float32, -0.3, 0.3)
    bc2 = jax.random.uniform(k3, (1,), jnp.float32, -0.3, 0.3)
    ws1_full = jax.random.uniform(k4, (1, 4, 7, 7), jnp.float32, -0.1, 0.1)
    bs1 = jax.random.uniform(k5, (1,), jnp.float32, -0.1, 0.1)
    ws2_full = jax.random.uniform(k6, (1, 4, 7, 7), jnp.float32, -0.1, 0.1)
    bs2 = jax.random.uniform(k7, (1,), jnp.float32, -0.1, 0.1)

    kernel_params = (wc1_full[0], bc1, wc2_full[0], bc2,
                     ws1_full[0], bs1, ws2_full[0], bs2)
    ref_params = (wc1_full, bc1, wc2_full, bc2,
                  ws1_full, bs1, ws2_full, bs2)

    out = jax.block_until_ready(tfam_pallas(t1, t2, kernel_params))
    ref = jax.block_until_ready(tfam_reference(t1, t2, ref_params, K))

    assert out.shape == (B, C, H, W)
    assert jnp.allclose(out, ref, rtol=1e-4, atol=1e-4), float(jnp.max(jnp.abs(out - ref)))

    print("KERNEL_OK")
</pallas_src>

<mosaic_0001>
module attributes {stable_mosaic.version = 11 : i64} {
  func.func @kernel(%arg0: i32, %arg1: memref<1x32x256xf32, #tpu.memory_space<vmem>>, %arg2: memref<1x32x256xf32, #tpu.memory_space<vmem>>, %arg3: memref<3x4xf32, #tpu.memory_space<vmem>>, %arg4: memref<4x49xf32, #tpu.memory_space<vmem>>, %arg5: memref<7x256xf32, #tpu.memory_space<vmem>>, %arg6: memref<2xf32, #tpu.memory_space<smem>>, %arg7: memref<1x32x256xf32, #tpu.memory_space<vmem>>, %arg8: memref<34x4xf32, #tpu.memory_space<vmem>>, %arg9: memref<4x358xf32, #tpu.memory_space<vmem>>) attributes {dimension_semantics = [#tpu.dimension_semantics<parallel>], iteration_bounds = array<i64: 2>, scalar_prefetch = 0 : i64, scratch_operands = 2 : i64, tpu.core_type = #tpu.core_type<tc>, window_params = [{transform_indices = @transform_0, window_bounds = array<i64: 1, 32, 256>}, {transform_indices = @transform_1, window_bounds = array<i64: 1, 32, 256>}, {pipeline_mode = #tpu.pipeline_mode<synchronous>, transform_indices = @transform_2, window_bounds = array<i64: 3, 4>}, {pipeline_mode = #tpu.pipeline_mode<synchronous>, transform_indices = @transform_3, window_bounds = array<i64: 4, 49>}, {pipeline_mode = #tpu.pipeline_mode<synchronous>, transform_indices = @transform_4, window_bounds = array<i64: 7, 256>}, {transform_indices = @transform_5, window_bounds = array<i64: 2>}, {transform_indices = @transform_6, window_bounds = array<i64: 1, 32, 256>}]} {
    %c0 = arith.constant 0 : index
    %0 = memref.load %arg6[%c0] : memref<2xf32, #tpu.memory_space<smem>>
    %c1 = arith.constant 1 : index
    %1 = memref.load %arg6[%c1] : memref<2xf32, #tpu.memory_space<smem>>
    %c0_0 = arith.constant 0 : index
    %c0_1 = arith.constant 0 : index
    %2 = vector.load %arg3[%c0_0, %c0_1] : memref<3x4xf32, #tpu.memory_space<vmem>>, vector<3x4xf32>
    %c0_2 = arith.constant 0 : index
    %c0_3 = arith.constant 0 : index
    %3 = vector.load %arg4[%c0_2, %c0_3] : memref<4x49xf32, #tpu.memory_space<vmem>>, vector<4x49xf32>
    %c0_4 = arith.constant 0 : index
    %c0_5 = arith.constant 0 : index
    %c0_6 = arith.constant 0 : index
    %4 = vector.load %arg1[%c0_4, %c0_5, %c0_6] : memref<1x32x256xf32, #tpu.memory_space<vmem>>, vector<1x32x256xf32>
    %5 = vector.shape_cast %4 : vector<1x32x256xf32> to vector<32x256xf32>
    %c0_7 = arith.constant 0 : index
    %c0_8 = arith.constant 0 : index
    %c0_9 = arith.constant 0 : index
    %6 = vector.load %arg2[%c0_7, %c0_8, %c0_9] : memref<1x32x256xf32, #tpu.memory_space<vmem>>, vector<1x32x256xf32>
    %7 = vector.shape_cast %6 : vector<1x32x256xf32> to vector<32x256xf32>
    %cst = arith.constant dense<0.000000e+00> : vector<32xf32>
    %8 = vector.multi_reduction <add>, %5, %cst [1] : vector<32x256xf32> to vector<32xf32>
    %9 = vector.shape_cast %8 : vector<32xf32> to vector<32x1xf32>
    %cst_10 = arith.constant 2.560000e+02 : f32
    %10 = vector.broadcast %cst_10 : f32 to vector<32x1xf32>
    %11 = arith.divf %9, %10 : vector<32x1xf32>
    %cst_11 = arith.constant dense<0xFF800000> : vector<32xf32>
    %12 = vector.multi_reduction <maximumf>, %5, %cst_11 [1] : vector<32x256xf32> to vector<32xf32>
    %13 = vector.shape_cast %12 : vector<32xf32> to vector<32x1xf32>
    %cst_12 = arith.constant dense<0.000000e+00> : vector<32xf32>
    %14 = vector.multi_reduction <add>, %7, %cst_12 [1] : vector<32x256xf32> to vector<32xf32>
    %15 = vector.shape_cast %14 : vector<32xf32> to vector<32x1xf32>
    %cst_13 = arith.constant 2.560000e+02 : f32
    %16 = vector.broadcast %cst_13 : f32 to vector<32x1xf32>
    %17 = arith.divf %15, %16 : vector<32x1xf32>
    %cst_14 = arith.constant dense<0xFF800000> : vector<32xf32>
    %18 = vector.multi_reduction <maximumf>, %7, %cst_14 [1] : vector<32x256xf32> to vector<32xf32>
    %19 = vector.shape_cast %18 : vector<32xf32> to vector<32x1xf32>
    %20 = tpu.concatenate %11, %13, %17, %19 in 1 : vector<32x1xf32>, vector<32x1xf32>, vector<32x1xf32>, vector<32x1xf32> -> vector<32x4xf32>
    %cst_15 = arith.constant 0.000000e+00 : f32
    %21 = vector.broadcast %cst_15 : f32 to vector<1x4xf32>
    %22 = tpu.concatenate %21, %20, %21 in 0 : vector<1x4xf32>, vector<32x4xf32>, vector<1x4xf32> -> vector<34x4xf32>
    %c0_16 = arith.constant 0 : index
    %c0_17 = arith.constant 0 : index
    %23 = vector.load %arg8[%c0_16, %c0_17] : memref<34x4xf32, #tpu.memory_space<vmem>>, vector<34x4xf32>
    tpu.vector_store %arg8[%c0_16, %c0_17], %22 {strides = array<i32>} : memref<34x4xf32, #tpu.memory_space<vmem>>, vector<34x4xf32>,
    %cst_18 = arith.constant 0.000000e+00 : f32
    %24 = vector.broadcast %cst_18 : f32 to vector<32x4xf32>
    %25 = vector.extract_strided_slice %2 {offsets = [0, 0], sizes = [1, 4], strides = [1, 1]} : vector<3x4xf32> to vector<1x4xf32>
    %c0_19 = arith.constant 0 : index
    %c0_20 = arith.constant 0 : index
    %26 = vector.load %arg8[%c0_19, %c0_20] : memref<34x4xf32, #tpu.memory_space<vmem>>, vector<32x4xf32>
    %27 = vector.broadcast %25 : vector<1x4xf32> to vector<32x4xf32>
    %28 = arith.mulf %27, %26 : vector<32x4xf32>
    %29 = arith.addf %24, %28 : vector<32x4xf32>
    %30 = vector.extract_strided_slice %2 {offsets = [1, 0], sizes = [1, 4], strides = [1, 1]} : vector<3x4xf32> to vector<1x4xf32>
    %c1_21 = arith.constant 1 : index
    %c0_22 = arith.constant 0 : index
    %31 = vector.load %arg8[%c1_21, %c0_22] : memref<34x4xf32, #tpu.memory_space<vmem>>, vector<32x4xf32>
    %32 = vector.broadcast %30 : vector<1x4xf32> to vector<32x4xf32>
    %33 = arith.mulf %32, %31 : vector<32x4xf32>
    %34 = arith.addf %29, %33 : vector<32x4xf32>
    %35 = vector.extract_strided_slice %2 {offsets = [2, 0], sizes = [1, 4], strides = [1, 1]} : vector<3x4xf32> to vector<1x4xf32>
    %c2 = arith.constant 2 : index
    %c0_23 = arith.constant 0 : index
    %36 = vector.load %arg8[%c2, %c0_23] : memref<34x4xf32, #tpu.memory_space<vmem>>, vector<32x4xf32>
    %37 = vector.broadcast %35 : vector<1x4xf32> to vector<32x4xf32>
    %38 = arith.mulf %37, %36 : vector<32x4xf32>
    %39 = arith.addf %34, %38 : vector<32x4xf32>
    %cst_24 = arith.constant dense<0.000000e+00> : vector<32xf32>
    %40 = vector.multi_reduction <add>, %39, %cst_24 [1] : vector<32x4xf32> to vector<32xf32>
    %41 = vector.shape_cast %40 : vector<32xf32> to vector<32x1xf32>
    %42 = vector.broadcast %0 : f32 to vector<32x1xf32>
    %43 = arith.addf %41, %42 : vector<32x1xf32>
    %cst_25 = arith.constant 0.000000e+00 : f32
    %44 = vector.broadcast %cst_25 : f32 to vector<32x1xf32>
    %45 = arith.subf %44, %43 : vector<32x1xf32>
    %46 = math.exp %45 : vector<32x1xf32>
    %cst_26 = arith.constant 1.000000e+00 : f32
    %47 = vector.broadcast %cst_26 : f32 to vector<32x1xf32>
    %48 = arith.addf %47, %46 : vector<32x1xf32>
    %cst_27 = arith.constant 1.000000e+00 : f32
    %49 = vector.broadcast %cst_27 : f32 to vector<32x1xf32>
    %50 = arith.divf %49, %48 : vector<32x1xf32>
    %cst_28 = arith.constant dense<0.000000e+00> : vector<256xf32>
    %51 = vector.multi_reduction <add>, %5, %cst_28 [0] : vector<32x256xf32> to vector<256xf32>
    %52 = vector.shape_cast %51 : vector<256xf32> to vector<1x256xf32>
    %cst_29 = arith.constant 3.200000e+01 : f32
    %53 = vector.broadcast %cst_29 : f32 to vector<1x256xf32>
    %54 = arith.divf %52, %53 : vector<1x256xf32>
    %cst_30 = arith.constant dense<0xFF800000> : vector<256xf32>
    %55 = vector.multi_reduction <maximumf>, %5, %cst_30 [0] : vector<32x256xf32> to vector<256xf32>
    %56 = vector.shape_cast %55 : vector<256xf32> to vector<1x256xf32>
    %cst_31 = arith.constant dense<0.000000e+00> : vector<256xf32>
    %57 = vector.multi_reduction <add>, %7, %cst_31 [0] : vector<32x256xf32> to vector<256xf32>
    %58 = vector.shape_cast %57 : vector<256xf32> to vector<1x256xf32>
    %cst_32 = arith.constant 3.200000e+01 : f32
    %59 = vector.broadcast %cst_32 : f32 to vector<1x256xf32>
    %60 = arith.divf %58, %59 : vector<1x256xf32>
    %cst_33 = arith.constant dense<0xFF800000> : vector<256xf32>
    %61 = vector.multi_reduction <maximumf>, %7, %cst_33 [0] : vector<32x256xf32> to vector<256xf32>
    %62 = vector.shape_cast %61 : vector<256xf32> to vector<1x256xf32>
    %63 = tpu.concatenate %54, %56, %60, %62 in 0 : vector<1x256xf32>, vector<1x256xf32>, vector<1x256xf32>, vector<1x256xf32> -> vector<4x256xf32>
    %cst_34 = arith.constant 0.000000e+00 : f32
    %64 = vector.broadcast %cst_34 : f32 to vector<4x51xf32>
    %65 = tpu.concatenate %64, %63, %64 in 1 : vector<4x51xf32>, vector<4x256xf32>, vector<4x51xf32> -> vector<4x358xf32>
    %c0_35 = arith.constant 0 : index
    %c0_36 = arith.constant 0 : index
    %66 = vector.load %arg9[%c0_35, %c0_36] : memref<4x358xf32, #tpu.memory_space<vmem>>, vector<4x358xf32>
    tpu.vector_store %arg9[%c0_35, %c0_36], %65 {strides = array<i32>} : memref<4x358xf32, #tpu.memory_space<vmem>>, vector<4x358xf32>,
    %cst_37 = arith.constant 0.000000e+00 : f32
    %67 = vector.broadcast %cst_37 : f32 to vector<4x256xf32>
    %cst_38 = arith.constant 0.000000e+00 : f32
    %68 = vector.broadcast %cst_38 : f32 to vector<4x256xf32>
    %c0_39 = arith.constant 0 : index
    %c0_40 = arith.constant 0 : index
    %69 = vector.load %arg9[%c0_39, %c0_40] : memref<4x358xf32, #tpu.memory_space<vmem>>, vector<4x256xf32>
    %70 = vector.extract_strided_slice %3 {offsets = [0, 0], sizes = [4, 1], strides = [1, 1]} : vector<4x49xf32> to vector<4x1xf32>
    %71 = vector.broadcast %70 : vector<4x1xf32> to vector<4x256xf32>
    %72 = arith.mulf %71, %69 : vector<4x256xf32>
    %73 = arith.addf %68, %72 : vector<4x256xf32>
    %c0_41 = arith.constant 0 : index
    %c16 = arith.constant 16 : index
    %74 = vector.load %arg9[%c0_41, %c16] : memref<4x358xf32, #tpu.memory_space<vmem>>, vector<4x256xf32>
    %75 = vector.extract_strided_slice %3 {offsets = [0, 7], sizes = [4, 1], strides = [1, 1]} : vector<4x49xf32> to vector<4x1xf32>
    %76 = vector.broadcast %75 : vector<4x1xf32> to vector<4x256xf32>
    %77 = arith.mulf %76, %74 : vector<4x256xf32>
    %78 = arith.addf %73, %77 : vector<4x256xf32>
    %c0_42 = arith.constant 0 : index
    %c32 = arith.constant 32 : index
    %79 = vector.load %arg9[%c0_42, %c32] : memref<4x358xf32, #tpu.memory_space<vmem>>, vector<4x256xf32>
    %80 = vector.extract_strided_slice %3 {offsets = [0, 14], sizes = [4, 1], strides = [1, 1]} : vector<4x49xf32> to vector<4x1xf32>
    %81 = vector.broadcast %80 : vector<4x1xf32> to vector<4x256xf32>
    %82 = arith.mulf %81, %79 : vector<4x256xf32>
    %83 = arith.addf %78, %82 : vector<4x256xf32>
    %c0_43 = arith.constant 0 : index
    %c48 = arith.constant 48 : index
    %84 = vector.load %arg9[%c0_43, %c48] : memref<4x358xf32, #tpu.memory_space<vmem>>, vector<4x256xf32>
    %85 = vector.extract_strided_slice %3 {offsets = [0, 21], sizes = [4, 1], strides = [1, 1]} : vector<4x49xf32> to vector<4x1xf32>
    %86 = vector.broadcast %85 : vector<4x1xf32> to vector<4x256xf32>
    %87 = arith.mulf %86, %84 : vector<4x256xf32>
    %88 = arith.addf %83, %87 : vector<4x256xf32>
    %c0_44 = arith.constant 0 : index
    %c64 = arith.constant 64 : index
    %89 = vector.load %arg9[%c0_44, %c64] : memref<4x358xf32, #tpu.memory_space<vmem>>, vector<4x256xf32>
    %90 = vector.extract_strided_slice %3 {offsets = [0, 28], sizes = [4, 1], strides = [1, 1]} : vector<4x49xf32> to vector<4x1xf32>
    %91 = vector.broadcast %90 : vector<4x1xf32> to vector<4x256xf32>
    %92 = arith.mulf %91, %89 : vector<4x256xf32>
    %93 = arith.addf %88, %92 : vector<4x256xf32>
    %c0_45 = arith.constant 0 : index
    %c80 = arith.constant 80 : index
    %94 = vector.load %arg9[%c0_45, %c80] : memref<4x358xf32, #tpu.memory_space<vmem>>, vector<4x256xf32>
    %95 = vector.extract_strided_slice %3 {offsets = [0, 35], sizes = [4, 1], strides = [1, 1]} : vector<4x49xf32> to vector<4x1xf32>
    %96 = vector.broadcast %95 : vector<4x1xf32> to vector<4x256xf32>
    %97 = arith.mulf %96, %94 : vector<4x256xf32>
    %98 = arith.addf %93, %97 : vector<4x256xf32>
    %c0_46 = arith.constant 0 : index
    %c96 = arith.constant 96 : index
    %99 = vector.load %arg9[%c0_46, %c96] : memref<4x358xf32, #tpu.memory_space<vmem>>, vector<4x256xf32>
    %100 = vector.extract_strided_slice %3 {offsets = [0, 42], sizes = [4, 1], strides = [1, 1]} : vector<4x49xf32> to vector<4x1xf32>
    %101 = vector.broadcast %100 : vector<4x1xf32> to vector<4x256xf32>
    %102 = arith.mulf %101, %99 : vector<4x256xf32>
    %103 = arith.addf %98, %102 : vector<4x256xf32>
    %c0_47 = arith.constant 0 : index
    %c0_48 = arith.constant 0 : index
    %104 = vector.load %arg5[%c0_47, %c0_48] : memref<7x256xf32, #tpu.memory_space<vmem>>, vector<1x256xf32>
    %105 = vector.broadcast %104 : vector<1x256xf32> to vector<4x256xf32>
    %106 = arith.mulf %103, %105 : vector<4x256xf32>
    %107 = arith.addf %67, %106 : vector<4x256xf32>
    %cst_49 = arith.constant 0.000000e+00 : f32
    %108 = vector.broadcast %cst_49 : f32 to vector<4x256xf32>
    %c0_50 = arith.constant 0 : index
    %c1_51 = arith.constant 1 : index
    %109 = vector.load %arg9[%c0_50, %c1_51] : memref<4x358xf32, #tpu.memory_space<vmem>>, vector<4x256xf32>
    %110 = vector.extract_strided_slice %3 {offsets = [0, 1], sizes = [4, 1], strides = [1, 1]} : vector<4x49xf32> to vector<4x1xf32>
    %111 = vector.broadcast %110 : vector<4x1xf32> to vector<4x256xf32>
    %112 = arith.mulf %111, %109 : vector<4x256xf32>
    %113 = arith.addf %108, %112 : vector<4x256xf32>
    %c0_52 = arith.constant 0 : index
    %c17 = arith.constant 17 : index
    %114 = vector.load %arg9[%c0_52, %c17] : memref<4x358xf32, #tpu.memory_space<vmem>>, vector<4x256xf32>
    %115 = vector.extract_strided_slice %3 {offsets = [0, 8], sizes = [4, 1], strides = [1, 1]} : vector<4x49xf32> to vector<4x1xf32>
    %116 = vector.broadcast %115 : vector<4x1xf32> to vector<4x256xf32>
    %117 = arith.mulf %116, %114 : vector<4x256xf32>
    %118 = arith.addf %113, %117 : vector<4x256xf32>
    %c0_53 = arith.constant 0 : index
    %c33 = arith.constant 33 : index
    %119 = vector.load %arg9[%c0_53, %c33] : memref<4x358xf32, #tpu.memory_space<vmem>>, vector<4x256xf32>
    %120 = vector.extract_strided_slice %3 {offsets = [0, 15], sizes = [4, 1], strides = [1, 1]} : vector<4x49xf32> to vector<4x1xf32>
    %121 = vector.broadcast %120 : vector<4x1xf32> to vector<4x256xf32>
    %122 = arith.mulf %121, %119 : vector<4x256xf32>
    %123 = arith.addf %118, %122 : vector<4x256xf32>
    %c0_54 = arith.constant 0 : index
    %c49 = arith.constant 49 : index
    %124 = vector.load %arg9[%c0_54, %c49] : memref<4x358xf32, #tpu.memory_space<vmem>>, vector<4x256xf32>
    %125 = vector.extract_strided_slice %3 {offsets = [0, 22], sizes = [4, 1], strides = [1, 1]} : vector<4x49xf32> to vector<4x1xf32>
    %126 = vector.broadcast %125 : vector<4x1xf32> to vector<4x256xf32>
    %127 = arith.mulf %126, %124 : vector<4x256xf32>
    %128 = arith.addf %123, %127 : vector<4x256xf32>
    %c0_55 = arith.constant 0 : index
    %c65 = arith.constant 65 : index
    %129 = vector.load %arg9[%c0_55, %c65] : memref<4x358xf32, #tpu.memory_space<vmem>>, vector<4x256xf32>
    %130 = vector.extract_strided_slice %3 {offsets = [0, 29], sizes = [4, 1], strides = [1, 1]} : vector<4x49xf32> to vector<4x1xf32>
    %131 = vector.broadcast %130 : vector<4x1xf32> to vector<4x256xf32>
    %132 = arith.mulf %131, %129 : vector<4x256xf32>
    %133 = arith.addf %128, %132 : vector<4x256xf32>
    %c0_56 = arith.constant 0 : index
    %c81 = arith.constant 81 : index
    %134 = vector.load %arg9[%c0_56, %c81] : memref<4x358xf32, #tpu.memory_space<vmem>>, vector<4x256xf32>
    %135 = vector.extract_strided_slice %3 {offsets = [0, 36], sizes = [4, 1], strides = [1, 1]} : vector<4x49xf32> to vector<4x1xf32>
    %136 = vector.broadcast %135 : vector<4x1xf32> to vector<4x256xf32>
    %137 = arith.mulf %136, %134 : vector<4x256xf32>
    %138 = arith.addf %133, %137 : vector<4x256xf32>
    %c0_57 = arith.constant 0 : index
    %c97 = arith.constant 97 : index
    %139 = vector.load %arg9[%c0_57, %c97] : memref<4x358xf32, #tpu.memory_space<vmem>>, vector<4x256xf32>
    %140 = vector.extract_strided_slice %3 {offsets = [0, 43], sizes = [4, 1], strides = [1, 1]} : vector<4x49xf32> to vector<4x1xf32>
    %141 = vector.broadcast %140 : vector<4x1xf32> to vector<4x256xf32>
    %142 = arith.mulf %141, %139 : vector<4x256xf32>
    %143 = arith.addf %138, %142 : vector<4x256xf32>
    %c1_58 = arith.constant 1 : index
    %c0_59 = arith.constant 0 : index
    %144 = vector.load %arg5[%c1_58, %c0_59] : memref<7x256xf32, #tpu.memory_space<vmem>>, vector<1x256xf32>
    %145 = vector.broadcast %144 : vector<1x256xf32> to vector<4x256xf32>
    %146 = arith.mulf %143, %145 : vector<4x256xf32>
    %147 = arith.addf %107, %146 : vector<4x256xf32>
    %cst_60 = arith.constant 0.000000e+00 : f32
    %148 = vector.broadcast %cst_60 : f32 to vector<4x256xf32>
    %c0_61 = arith.constant 0 : index
    %c2_62 = arith.constant 2 : index
    %149 = vector.load %arg9[%c0_61, %c2_62] : memref<4x358xf32, #tpu.memory_space<vmem>>, vector<4x256xf32>
    %150 = vector.extract_strided_slice %3 {offsets = [0, 2], sizes = [4, 1], strides = [1, 1]} : vector<4x49xf32> to vector<4x1xf32>
    %151 = vector.broadcast %150 : vector<4x1xf32> to vector<4x256xf32>
    %152 = arith.mulf %151, %149 : vector<4x256xf32>
    %153 = arith.addf %148, %152 : vector<4x256xf32>
    %c0_63 = arith.constant 0 : index
    %c18 = arith.constant 18 : index
    %154 = vector.load %arg9[%c0_63, %c18] : memref<4x358xf32, #tpu.memory_space<vmem>>, vector<4x256xf32>
    %155 = vector.extract_strided_slice %3 {offsets = [0, 9], sizes = [4, 1], strides = [1, 1]} : vector<4x49xf32> to vector<4x1xf32>
    %156 = vector.broadcast %155 : vector<4x1xf32> to vector<4x256xf32>
    %157 = arith.mulf %156, %154 : vector<4x256xf32>
    %158 = arith.addf %153, %157 : vector<4x256xf32>
    %c0_64 = arith.constant 0 : index
    %c34 = arith.constant 34 : index
    %159 = vector.load %arg9[%c0_64, %c34] : memref<4x358xf32, #tpu.memory_space<vmem>>, vector<4x256xf32>
    %160 = vector.extract_strided_slice %3 {offsets = [0, 16], sizes = [4, 1], strides = [1, 1]} : vector<4x49xf32> to vector<4x1xf32>
    %161 = vector.broadcast %160 : vector<4x1xf32> to vector<4x256xf32>
    %162 = arith.mulf %161, %159 : vector<4x256xf32>
    %163 = arith.addf %158, %162 : vector<4x256xf32>
    %c0_65 = arith.constant 0 : index
    %c50 = arith.constant 50 : index
    %164 = vector.load %arg9[%c0_65, %c50] : memref<4x358xf32, #tpu.memory_space<vmem>>, vector<4x256xf32>
    %165 = vector.extract_strided_slice %3 {offsets = [0, 23], sizes = [4, 1], strides = [1, 1]} : vector<4x49xf32> to vector<4x1xf32>
    %166 = vector.broadcast %165 : vector<4x1xf32> to vector<4x256xf32>
    %167 = arith.mulf %166, %164 : vector<4x256xf32>
    %168 = arith.addf %163, %167 : vector<4x256xf32>
    %c0_66 = arith.constant 0 : index
    %c66 = arith.constant 66 : index
    %169 = vector.load %arg9[%c0_66, %c66] : memref<4x358xf32, #tpu.memory_space<vmem>>, vector<4x256xf32>
    %170 = vector.extract_strided_slice %3 {offsets = [0, 30], sizes = [4, 1], strides = [1, 1]} : vector<4x49xf32> to vector<4x1xf32>
    %171 = vector.broadcast %170 : vector<4x1xf32> to vector<4x256xf32>
    %172 = arith.mulf %171, %169 : vector<4x256xf32>
    %173 = arith.addf %168, %172 : vector<4x256xf32>
    %c0_67 = arith.constant 0 : index
    %c82 = arith.constant 82 : index
    %174 = vector.load %arg9[%c0_67, %c82] : memref<4x358xf32, #tpu.memory_space<vmem>>, vector<4x256xf32>
    %175 = vector.extract_strided_slice %3 {offsets = [0, 37], sizes = [4, 1], strides = [1, 1]} : vector<4x49xf32> to vector<4x1xf32>
    %176 = vector.broadcast %175 : vector<4x1xf32> to vector<4x256xf32>
    %177 = arith.mulf %176, %174 : vector<4x256xf32>
    %178 = arith.addf %173, %177 : vector<4x256xf32>
    %c0_68 = arith.constant 0 : index
    %c98 = arith.constant 98 : index
    %179 = vector.load %arg9[%c0_68, %c98] : memref<4x358xf32, #tpu.memory_space<vmem>>, vector<4x256xf32>
    %180 = vector.extract_strided_slice %3 {offsets = [0, 44], sizes = [4, 1], strides = [1, 1]} : vector<4x49xf32> to vector<4x1xf32>
    %181 = vector.broadcast %180 : vector<4x1xf32> to vector<4x256xf32>
    %182 = arith.mulf %181, %179 : vector<4x256xf32>
    %183 = arith.addf %178, %182 : vector<4x256xf32>
    %c2_69 = arith.constant 2 : index
    %c0_70 = arith.constant 0 : index
    %184 = vector.load %arg5[%c2_69, %c0_70] : memref<7x256xf32, #tpu.memory_space<vmem>>, vector<1x256xf32>
    %185 = vector.broadcast %184 : vector<1x256xf32> to vector<4x256xf32>
    %186 = arith.mulf %183, %185 : vector<4x256xf32>
    %187 = arith.addf %147, %186 : vector<4x256xf32>
    %cst_71 = arith.constant 0.000000e+00 : f32
    %188 = vector.broadcast %cst_71 : f32 to vector<4x256xf32>
    %c0_72 = arith.constant 0 : index
    %c3 = arith.constant 3 : index
    %189 = vector.load %arg9[%c0_72, %c3] : memref<4x358xf32, #tpu.memory_space<vmem>>, vector<4x256xf32>
    %190 = vector.extract_strided_slice %3 {offsets = [0, 3], sizes = [4, 1], strides = [1, 1]} : vector<4x49xf32> to vector<4x1xf32>
    %191 = vector.broadcast %190 : vector<4x1xf32> to vector<4x256xf32>
    %192 = arith.mulf %191, %189 : vector<4x256xf32>
    %193 = arith.addf %188, %192 : vector<4x256xf32>
    %c0_73 = arith.constant 0 : index
    %c19 = arith.constant 19 : index
    %194 = vector.load %arg9[%c0_73, %c19] : memref<4x358xf32, #tpu.memory_space<vmem>>, vector<4x256xf32>
    %195 = vector.extract_strided_slice %3 {offsets = [0, 10], sizes = [4, 1], strides = [1, 1]} : vector<4x49xf32> to vector<4x1xf32>
    %196 = vector.broadcast %195 : vector<4x1xf32> to vector<4x256xf32>
    %197 = arith.mulf %196, %194 : vector<4x256xf32>
    %198 = arith.addf %193, %197 : vector<4x256xf32>
    %c0_74 = arith.constant 0 : index
    %c35 = arith.constant 35 : index
    %199 = vector.load %arg9[%c0_74, %c35] : memref<4x358xf32, #tpu.memory_space<vmem>>, vector<4x256xf32>
    %200 = vector.extract_strided_slice %3 {offsets = [0, 17], sizes = [4, 1], strides = [1, 1]} : vector<4x49xf32> to vector<4x1xf32>
    %201 = vector.broadcast %200 : vector<4x1xf32> to vector<4x256xf32>
    %202 = arith.mulf %201, %199 : vector<4x256xf32>
    %203 = arith.addf %198, %202 : vector<4x256xf32>
    %c0_75 = arith.constant 0 : index
    %c51 = arith.constant 51 : index
    %204 = vector.load %arg9[%c0_75, %c51] : memref<4x358xf32, #tpu.memory_space<vmem>>, vector<4x256xf32>
    %205 = vector.extract_strided_slice %3 {offsets = [0, 24], sizes = [4, 1], strides = [1, 1]} : vector<4x49xf32> to vector<4x1xf32>
    %206 = vector.broadcast %205 : vector<4x1xf32> to vector<4x256xf32>
    %207 = arith.mulf %206, %204 : vector<4x256xf32>
    %208 = arith.addf %203, %207 : vector<4x256xf32>
    %c0_76 = arith.constant 0 : index
    %c67 = arith.constant 67 : index
    %209 = vector.load %arg9[%c0_76, %c67] : memref<4x358xf32, #tpu.memory_space<vmem>>, vector<4x256xf32>
    %210 = vector.extract_strided_slice %3 {offsets = [0, 31], sizes = [4, 1], strides = [1, 1]} : vector<4x49xf32> to vector<4x1xf32>
    %211 = vector.broadcast %210 : vector<4x1xf32> to vector<4x256xf32>
    %212 = arith.mulf %211, %209 : vector<4x256xf32>
    %213 = arith.addf %208, %212 : vector<4x256xf32>
    %c0_77 = arith.constant 0 : index
    %c83 = arith.constant 83 : index
    %214 = vector.load %arg9[%c0_77, %c83] : memref<4x358xf32, #tpu.memory_space<vmem>>, vector<4x256xf32>
    %215 = vector.extract_strided_slice %3 {offsets = [0, 38], sizes = [4, 1], strides = [1, 1]} : vector<4x49xf32> to vector<4x1xf32>
    %216 = vector.broadcast %215 : vector<4x1xf32> to vector<4x256xf32>
    %217 = arith.mulf %216, %214 : vector<4x256xf32>
    %218 = arith.addf %213, %217 : vector<4x256xf32>
    %c0_78 = arith.constant 0 : index
    %c99 = arith.constant 99 : index
    %219 = vector.load %arg9[%c0_78, %c99] : memref<4x358xf32, #tpu.memory_space<vmem>>, vector<4x256xf32>
    %220 = vector.extract_strided_slice %3 {offsets = [0, 45], sizes = [4, 1], strides = [1, 1]} : vector<4x49xf32> to vector<4x1xf32>
    %221 = vector.broadcast %220 : vector<4x1xf32> to vector<4x256xf32>
    %222 = arith.mulf %221, %219 : vector<4x256xf32>
    %223 = arith.addf %218, %222 : vector<4x256xf32>
    %c3_79 = arith.constant 3 : index
    %c0_80 = arith.constant 0 : index
    %224 = vector.load %arg5[%c3_79, %c0_80] : memref<7x256xf32, #tpu.memory_space<vmem>>, vector<1x256xf32>
    %225 = vector.broadcast %224 : vector<1x256xf32> to vector<4x256xf32>
    %226 = arith.mulf %223, %225 : vector<4x256xf32>
    %227 = arith.addf %187, %226 : vector<4x256xf32>
    %cst_81 = arith.constant 0.000000e+00 : f32
    %228 = vector.broadcast %cst_81 : f32 to vector<4x256xf32>
    %c0_82 = arith.constant 0 : index
    %c4 = arith.constant 4 : index
    %229 = vector.load %arg9[%c0_82, %c4] : memref<4x358xf32, #tpu.memory_space<vmem>>, vector<4x256xf32>
    %230 = vector.extract_strided_slice %3 {offsets = [0, 4], sizes = [4, 1], strides = [1, 1]} : vector<4x49xf32> to vector<4x1xf32>
    %231 = vector.broadcast %230 : vector<4x1xf32> to vector<4x256xf32>
    %232 = arith.mulf %231, %229 : vector<4x256xf32>
    %233 = arith.addf %228, %232 : vector<4x256xf32>
    %c0_83 = arith.constant 0 : index
    %c20 = arith.constant 20 : index
    %234 = vector.load %arg9[%c0_83, %c20] : memref<4x358xf32, #tpu.memory_space<vmem>>, vector<4x256xf32>
    %235 = vector.extract_strided_slice %3 {offsets = [0, 11], sizes = [4, 1], strides = [1, 1]} : vector<4x49xf32> to vector<4x1xf32>
    %236 = vector.broadcast %235 : vector<4x1xf32> to vector<4x256xf32>
    %237 = arith.mulf %236, %234 : vector<4x256xf32>
    %238 = arith.addf %233, %237 : vector<4x256xf32>
    %c0_84 = arith.constant 0 : index
    %c36 = arith.constant 36 : index
    %239 = vector.load %arg9[%c0_84, %c36] : memref<4x358xf32, #tpu.memory_space<vmem>>, vector<4x256xf32>
    %240 = vector.extract_strided_slice %3 {offsets = [0, 18], sizes = [4, 1], strides = [1, 1]} : vector<4x49xf32> to vector<4x1xf32>
    %241 = vector.broadcast %240 : vector<4x1xf32> to vector<4x256xf32>
    %242 = arith.mulf %241, %239 : vector<4x256xf32>
    %243 = arith.addf %238, %242 : vector<4x256xf32>
    %c0_85 = arith.constant 0 : index
    %c52 = arith.constant 52 : index
    %244 = vector.load %arg9[%c0_85, %c52] : memref<4x358xf32, #tpu.memory_space<vmem>>, vector<4x256xf32>
    %245 = vector.extract_strided_slice %3 {offsets = [0, 25], sizes = [4, 1], strides = [1, 1]} : vector<4x49xf32> to vector<4x1xf32>
    %246 = vector.broadcast %245 : vector<4x1xf32> to vector<4x256xf32>
    %247 = arith.mulf %246, %244 : vector<4x256xf32>
    %248 = arith.addf %243, %247 : vector<4x256xf32>
    %c0_86 = arith.constant 0 : index
    %c68 = arith.constant 68 : index
    %249 = vector.load %arg9[%c0_86, %c68] : memref<4x358xf32, #tpu.memory_space<vmem>>, vector<4x256xf32>
    %250 = vector.extract_strided_slice %3 {offsets = [0, 32], sizes = [4, 1], strides = [1, 1]} : vector<4x49xf32> to vector<4x1xf32>
    %251 = vector.broadcast %250 : vector<4x1xf32> to vector<4x256xf32>
    %252 = arith.mulf %251, %249 : vector<4x256xf32>
    %253 = arith.addf %248, %252 : vector<4x256xf32>
    %c0_87 = arith.constant 0 : index
    %c84 = arith.constant 84 : index
    %254 = vector.load %arg9[%c0_87, %c84] : memref<4x358xf32, #tpu.memory_space<vmem>>, vector<4x256xf32>
    %255 = vector.extract_strided_slice %3 {offsets = [0, 39], sizes = [4, 1], strides = [1, 1]} : vector<4x49xf32> to vector<4x1xf32>
    %256 = vector.broadcast %255 : vector<4x1xf32> to vector<4x256xf32>
    %257 = arith.mulf %256, %254 : vector<4x256xf32>
    %258 = arith.addf %253, %257 : vector<4x256xf32>
    %c0_88 = arith.constant 0 : index
    %c100 = arith.constant 100 : index
    %259 = vector.load %arg9[%c0_88, %c100] : memref<4x358xf32, #tpu.memory_space<vmem>>, vector<4x256xf32>
    %260 = vector.extract_strided_slice %3 {offsets = [0, 46], sizes = [4, 1], strides = [1, 1]} : vector<4x49xf32> to vector<4x1xf32>
    %261 = vector.broadcast %260 : vector<4x1xf32> to vector<4x256xf32>
    %262 = arith.mulf %261, %259 : vector<4x256xf32>
    %263 = arith.addf %258, %262 : vector<4x256xf32>
    %c4_89 = arith.constant 4 : index
    %c0_90 = arith.constant 0 : index
    %264 = vector.load %arg5[%c4_89, %c0_90] : memref<7x256xf32, #tpu.memory_space<vmem>>, vector<1x256xf32>
    %265 = vector.broadcast %264 : vector<1x256xf32> to vector<4x256xf32>
    %266 = arith.mulf %263, %265 : vector<4x256xf32>
    %267 = arith.addf %227, %266 : vector<4x256xf32>
    %cst_91 = arith.constant 0.000000e+00 : f32
    %268 = vector.broadcast %cst_91 : f32 to vector<4x256xf32>
    %c0_92 = arith.constant 0 : index
    %c5 = arith.constant 5 : index
    %269 = vector.load %arg9[%c0_92, %c5] : memref<4x358xf32, #tpu.memory_space<vmem>>, vector<4x256xf32>
    %270 = vector.extract_strided_slice %3 {offsets = [0, 5], sizes = [4, 1], strides = [1, 1]} : vector<4x49xf32> to vector<4x1xf32>
    %271 = vector.broadcast %270 : vector<4x1xf32> to vector<4x256xf32>
    %272 = arith.mulf %271, %269 : vector<4x256xf32>
    %273 = arith.addf %268, %272 : vector<4x256xf32>
    %c0_93 = arith.constant 0 : index
    %c21 = arith.constant 21 : index
    %274 = vector.load %arg9[%c0_93, %c21] : memref<4x358xf32, #tpu.memory_space<vmem>>, vector<4x256xf32>
    %275 = vector.extract_strided_slice %3 {offsets = [0, 12], sizes = [4, 1], strides = [1, 1]} : vector<4x49xf32> to vector<4x1xf32>
    %276 = vector.broadcast %275 : vector<4x1xf32> to vector<4x256xf32>
    %277 = arith.mulf %276, %274 : vector<4x256xf32>
    %278 = arith.addf %273, %277 : vector<4x256xf32>
    %c0_94 = arith.constant 0 : index
    %c37 = arith.constant 37 : index
    %279 = vector.load %arg9[%c0_94, %c37] : memref<4x358xf32, #tpu.memory_space<vmem>>, vector<4x256xf32>
    %280 = vector.extract_strided_slice %3 {offsets = [0, 19], sizes = [4, 1], strides = [1, 1]} : vector<4x49xf32> to vector<4x1xf32>
    %281 = vector.broadcast %280 : vector<4x1xf32> to vector<4x256xf32>
    %282 = arith.mulf %281, %279 : vector<4x256xf32>
    %283 = arith.addf %278, %282 : vector<4x256xf32>
    %c0_95 = arith.constant 0 : index
    %c53 = arith.constant 53 : index
    %284 = vector.load %arg9[%c0_95, %c53] : memref<4x358xf32, #tpu.memory_space<vmem>>, vector<4x256xf32>
    %285 = vector.extract_strided_slice %3 {offsets = [0, 26], sizes = [4, 1], strides = [1, 1]} : vector<4x49xf32> to vector<4x1xf32>
    %286 = vector.broadcast %285 : vector<4x1xf32> to vector<4x256xf32>
    %287 = arith.mulf %286, %284 : vector<4x256xf32>
    %288 = arith.addf %283, %287 : vector<4x256xf32>
    %c0_96 = arith.constant 0 : index
    %c69 = arith.constant 69 : index
    %289 = vector.load %arg9[%c0_96, %c69] : memref<4x358xf32, #tpu.memory_space<vmem>>, vector<4x256xf32>
    %290 = vector.extract_strided_slice %3 {offsets = [0, 33], sizes = [4, 1], strides = [1, 1]} : vector<4x49xf32> to vector<4x1xf32>
    %291 = vector.broadcast %290 : vector<4x1xf32> to vector<4x256xf32>
    %292 = arith.mulf %291, %289 : vector<4x256xf32>
    %293 = arith.addf %288, %292 : vector<4x256xf32>
    %c0_97 = arith.constant 0 : index
    %c85 = arith.constant 85 : index
    %294 = vector.load %arg9[%c0_97, %c85] : memref<4x358xf32, #tpu.memory_space<vmem>>, vector<4x256xf32>
    %295 = vector.extract_strided_slice %3 {offsets = [0, 40], sizes = [4, 1], strides = [1, 1]} : vector<4x49xf32> to vector<4x1xf32>
    %296 = vector.broadcast %295 : vector<4x1xf32> to vector<4x256xf32>
    %297 = arith.mulf %296, %294 : vector<4x256xf32>
    %298 = arith.addf %293, %297 : vector<4x256xf32>
    %c0_98 = arith.constant 0 : index
    %c101 = arith.constant 101 : index
    %299 = vector.load %arg9[%c0_98, %c101] : memref<4x358xf32, #tpu.memory_space<vmem>>, vector<4x256xf32>
    %300 = vector.extract_strided_slice %3 {offsets = [0, 47], sizes = [4, 1], strides = [1, 1]} : vector<4x49xf32> to vector<4x1xf32>
    %301 = vector.broadcast %300 : vector<4x1xf32> to vector<4x256xf32>
    %302 = arith.mulf %301, %299 : vector<4x256xf32>
    %303 = arith.addf %298, %302 : vector<4x256xf32>
    %c5_99 = arith.constant 5 : index
    %c0_100 = arith.constant 0 : index
    %304 = vector.load %arg5[%c5_99, %c0_100] : memref<7x256xf32, #tpu.memory_space<vmem>>, vector<1x256xf32>
    %305 = vector.broadcast %304 : vector<1x256xf32> to vector<4x256xf32>
    %306 = arith.mulf %303, %305 : vector<4x256xf32>
    %307 = arith.addf %267, %306 : vector<4x256xf32>
    %cst_101 = arith.constant 0.000000e+00 : f32
    %308 = vector.broadcast %cst_101 : f32 to vector<4x256xf32>
    %c0_102 = arith.constant 0 : index
    %c6 = arith.constant 6 : index
    %309 = vector.load %arg9[%c0_102, %c6] : memref<4x358xf32, #tpu.memory_space<vmem>>, vector<4x256xf32>
    %310 = vector.extract_strided_slice %3 {offsets = [0, 6], sizes = [4, 1], strides = [1, 1]} : vector<4x49xf32> to vector<4x1xf32>
    %311 = vector.broadcast %310 : vector<4x1xf32> to vector<4x256xf32>
    %312 = arith.mulf %311, %309 : vector<4x256xf32>
    %313 = arith.addf %308, %312 : vector<4x256xf32>
    %c0_103 = arith.constant 0 : index
    %c22 = arith.constant 22 : index
    %314 = vector.load %arg9[%c0_103, %c22] : memref<4x358xf32, #tpu.memory_space<vmem>>, vector<4x256xf32>
    %315 = vector.extract_strided_slice %3 {offsets = [0, 13], sizes = [4, 1], strides = [1, 1]} : vector<4x49xf32> to vector<4x1xf32>
    %316 = vector.broadcast %315 : vector<4x1xf32> to vector<4x256xf32>
    %317 = arith.mulf %316, %314 : vector<4x256xf32>
    %318 = arith.addf %313, %317 : vector<4x256xf32>
    %c0_104 = arith.constant 0 : index
    %c38 = arith.constant 38 : index
    %319 = vector.load %arg9[%c0_104, %c38] : memref<4x358xf32, #tpu.memory_space<vmem>>, vector<4x256xf32>
    %320 = vector.extract_strided_slice %3 {offsets = [0, 20], sizes = [4, 1], strides = [1, 1]} : vector<4x49xf32> to vector<4x1xf32>
    %321 = vector.broadcast %320 : vector<4x1xf32> to vector<4x256xf32>
    %322 = arith.mulf %321, %319 : vector<4x256xf32>
    %323 = arith.addf %318, %322 : vector<4x256xf32>
    %c0_105 = arith.constant 0 : index
    %c54 = arith.constant 54 : index
    %324 = vector.load %arg9[%c0_105, %c54] : memref<4x358xf32, #tpu.memory_space<vmem>>, vector<4x256xf32>
    %325 = vector.extract_strided_slice %3 {offsets = [0, 27], sizes = [4, 1], strides = [1, 1]} : vector<4x49xf32> to vector<4x1xf32>
    %326 = vector.broadcast %325 : vector<4x1xf32> to vector<4x256xf32>
    %327 = arith.mulf %326, %324 : vector<4x256xf32>
    %328 = arith.addf %323, %327 : vector<4x256xf32>
    %c0_106 = arith.constant 0 : index
    %c70 = arith.constant 70 : index
    %329 = vector.load %arg9[%c0_106, %c70] : memref<4x358xf32, #tpu.memory_space<vmem>>, vector<4x256xf32>
    %330 = vector.extract_strided_slice %3 {offsets = [0, 34], sizes = [4, 1], strides = [1, 1]} : vector<4x49xf32> to vector<4x1xf32>
    %331 = vector.broadcast %330 : vector<4x1xf32> to vector<4x256xf32>
    %332 = arith.mulf %331, %329 : vector<4x256xf32>
    %333 = arith.addf %328, %332 : vector<4x256xf32>
    %c0_107 = arith.constant 0 : index
    %c86 = arith.constant 86 : index
    %334 = vector.load %arg9[%c0_107, %c86] : memref<4x358xf32, #tpu.memory_space<vmem>>, vector<4x256xf32>
    %335 = vector.extract_strided_slice %3 {offsets = [0, 41], sizes = [4, 1], strides = [1, 1]} : vector<4x49xf32> to vector<4x1xf32>
    %336 = vector.broadcast %335 : vector<4x1xf32> to vector<4x256xf32>
    %337 = arith.mulf %336, %334 : vector<4x256xf32>
    %338 = arith.addf %333, %337 : vector<4x256xf32>
    %c0_108 = arith.constant 0 : index
    %c102 = arith.constant 102 : index
    %339 = vector.load %arg9[%c0_108, %c102] : memref<4x358xf32, #tpu.memory_space<vmem>>, vector<4x256xf32>
    %340 = vector.extract_strided_slice %3 {offsets = [0, 48], sizes = [4, 1], strides = [1, 1]} : vector<4x49xf32> to vector<4x1xf32>
    %341 = vector.broadcast %340 : vector<4x1xf32> to vector<4x256xf32>
    %342 = arith.mulf %341, %339 : vector<4x256xf32>
    %343 = arith.addf %338, %342 : vector<4x256xf32>
    %c6_109 = arith.constant 6 : index
    %c0_110 = arith.constant 0 : index
    %344 = vector.load %arg5[%c6_109, %c0_110] : memref<7x256xf32, #tpu.memory_space<vmem>>, vector<1x256xf32>
    %345 = vector.broadcast %344 : vector<1x256xf32> to vector<4x256xf32>
    %346 = arith.mulf %343, %345 : vector<4x256xf32>
    %347 = arith.addf %307, %346 : vector<4x256xf32>
    %cst_111 = arith.constant dense<0.000000e+00> : vector<256xf32>
    %348 = vector.multi_reduction <add>, %347, %cst_111 [0] : vector<4x256xf32> to vector<256xf32>
    %349 = vector.shape_cast %348 : vector<256xf32> to vector<1x256xf32>
    %350 = vector.broadcast %1 : f32 to vector<1x256xf32>
    %351 = arith.addf %349, %350 : vector<1x256xf32>
    %cst_112 = arith.constant 0.000000e+00 : f32
    %352 = vector.broadcast %cst_112 : f32 to vector<1x256xf32>
    %353 = arith.subf %352, %351 : vector<1x256xf32>
    %354 = math.exp %353 : vector<1x256xf32>
    %cst_113 = arith.constant 1.000000e+00 : f32
    %355 = vector.broadcast %cst_113 : f32 to vector<1x256xf32>
    %356 = arith.addf %355, %354 : vector<1x256xf32>
    %cst_114 = arith.constant 1.000000e+00 : f32
    %357 = vector.broadcast %cst_114 : f32 to vector<1x256xf32>
    %358 = arith.divf %357, %356 : vector<1x256xf32>
    %359 = vector.broadcast %50 : vector<32x1xf32> to vector<32x256xf32>
    %360 = vector.broadcast %358 : vector<1x256xf32> to vector<32x256xf32>
    %361 = arith.addf %359, %360 : vector<32x256xf32>
    %cst_115 = arith.constant 3.000000e+00 : f32
    %362 = vector.broadcast %cst_115 : f32 to vector<32x256xf32>
    %363 = arith.mulf %362, %7 : vector<32x256xf32>
    %364 = arith.addf %5, %363 : vector<32x256xf32>
    %365 = arith.subf %5, %7 : vector<32x256xf32>
    %366 = arith.mulf %361, %365 : vector<32x256xf32>
    %367 = arith.addf %364, %366 : vector<32x256xf32>
    %c0_116 = arith.constant 0 : index
    %c0_117 = arith.constant 0 : index
    %c0_118 = arith.constant 0 : index
    %368 = vector.load %arg7[%c0_116, %c0_117, %c0_118] : memref<1x32x256xf32, #tpu.memory_space<vmem>>, vector<1x32x256xf32>
    %369 = vector.shape_cast %368 : vector<1x32x256xf32> to vector<32x256xf32>
    %370 = vector.shape_cast %367 : vector<32x256xf32> to vector<1x32x256xf32>
    tpu.vector_store %arg7[%c0_116, %c0_117, %c0_118], %370 {strides = array<i32>} : memref<1x32x256xf32, #tpu.memory_space<vmem>>, vector<1x32x256xf32>,
    return
  }
  func.func @transform_0(%arg0: i32) -> (i32, i32, i32) {
    %c0_i32 = arith.constant 0 : i32
    %c0_i32_0 = arith.constant 0 : i32
    %c0_i32_1 = arith.constant 0 : i32
    return %arg0, %c0_i32, %c0_i32_0 : i32, i32, i32
  }
  func.func @transform_1(%arg0: i32) -> (i32, i32, i32) {
    %c0_i32 = arith.constant 0 : i32
    %c0_i32_0 = arith.constant 0 : i32
    %c0_i32_1 = arith.constant 0 : i32
    return %arg0, %c0_i32, %c0_i32_0 : i32, i32, i32
  }
  func.func @transform_2(%arg0: i32) -> (i32, i32) {
    %c0_i32 = arith.constant 0 : i32
    %c0_i32_0 = arith.constant 0 : i32
    %c0_i32_1 = arith.constant 0 : i32
    return %c0_i32, %c0_i32_0 : i32, i32
  }
  func.func @transform_3(%arg0: i32) -> (i32, i32) {
    %c0_i32 = arith.constant 0 : i32
    %c0_i32_0 = arith.constant 0 : i32
    %c0_i32_1 = arith.constant 0 : i32
    return %c0_i32, %c0_i32_0 : i32, i32
  }
  func.func @transform_4(%arg0: i32) -> (i32, i32) {
    %c0_i32 = arith.constant 0 : i32
    %c0_i32_0 = arith.constant 0 : i32
    %c0_i32_1 = arith.constant 0 : i32
    return %c0_i32, %c0_i32_0 : i32, i32
  }
  func.func @transform_5(%arg0: i32) -> i32 {
    %c0_i32 = arith.constant 0 : i32
    %c0_i32_0 = arith.constant 0 : i32
    return %c0_i32 : i32
  }
  func.func @transform_6(%arg0: i32) -> (i32, i32, i32) {
    %c0_i32 = arith.constant 0 : i32
    %c0_i32_0 = arith.constant 0 : i32
    %c0_i32_1 = arith.constant 0 : i32
    return %arg0, %c0_i32, %c0_i32_0 : i32, i32, i32
  }
}

</mosaic_0001>

<llo_original>
// kernel: tpu_custom_call.1
$region0: #{tpu_custom_call.1}
  #allocation0 [shape = 'u32[]', space=smem, size = 0x4, offset = 0x4, fixed_abs, tag = 'smem constant byte address 0x4 - core index']
  #allocation1 [shape = 'u32[144,128]{1,0:T(1,128)}', space=vmem, size = 0x12000, scoped, tag = 'internal scratch']
  #allocation2 [shape = 'f32[34,4]{1,0:T(8,128)}', space=vmem, size = 0x5000, scoped, tag = 'scratch operand']
  #allocation3 [shape = 'f32[4,358]{1,0:T(4,128)}', space=vmem, size = 0x1800, scoped, tag = 'scratch operand']
  %s0 = inlined_call_operand.hbm [shape: f32[2,32,256], index: 0, kind: input, shape index: {}]
  %s1 = inlined_call_operand.hbm [shape: f32[2,32,256], index: 1, kind: input, shape index: {}]
  %s2 = inlined_call_operand.vmem [shape: f32[3,4], index: 2, kind: input, shape index: {}]
  %s3 = inlined_call_operand.vmem [shape: f32[4,49], index: 3, kind: input, shape index: {}]
  %s4 = inlined_call_operand.hbm [shape: f32[7,256], index: 4, kind: input, shape index: {}]
  %s5 = inlined_call_operand.vmem [shape: f32[2], index: 5, kind: input, shape index: {}]
  %s6 = inlined_call_operand.hbm [shape: f32[2,32,256], index: 6, kind: output, shape index: {}]
  %s7 = sld [smem:[#allocation0]]
  $region73: #{tpu_custom_call.1} parent=0
    _
  %s9 = ssub.s32 1, %s7
  %s10 = scalar_select 0, %s9, %s7
  $region1: #{tpu_custom_call.1} parent=0
    #allocation4 [shape = 'u8[65536]{0}', space=vmem, size = 0x10000, scoped, tag = 'input window, operand 0']
    #allocation5 [shape = 's32[2]{0}', space=sflag, size = 0x8, scoped, tag = 'scoped memory for tpu_custom_call.1']
    #allocation6 [shape = 's32[2]{0}', space=sflag, size = 0x8, scoped, tag = 'scoped memory for tpu_custom_call.1']
    #allocation7 [shape = 's32[2]{0}', space=sflag, size = 0x8, scoped, tag = 'scoped memory for tpu_custom_call.1']
    #allocation8 [shape = 'u8[65536]{0}', space=vmem, size = 0x10000, scoped, tag = 'input window, operand 1']
    #allocation9 [shape = 's32[2]{0}', space=sflag, size = 0x8, scoped, tag = 'scoped memory for tpu_custom_call.1']
    #allocation10 [shape = 'u8[8192]{0}', space=vmem, size = 0x2000, scoped, tag = 'input window, operand 4, single buffered']
    #allocation11 [shape = 'u8[512]{0}', space=smem, size = 0x200, scoped, tag = 'input window, operand 5, single buffered']
    #allocation12 [shape = 'u8[65536]{0}', space=vmem, size = 0x10000, scoped, tag = 'output window, operand 0']
    %11 = vsyncpa [#allocation5], 0
    %s12 = scalar_lea.sflag [#allocation5], 1
    %13 = vsyncpa %s12, 0
    %14 = vsyncpa [#allocation9], 0
    %s15 = scalar_lea.sflag [#allocation9], 1
    %16 = vsyncpa %s15, 0
    %17 = vsyncpa [#allocation7], 0
    %18 = vsyncpa [#allocation6], 0
    %s19 = scalar_lea.sflag [#allocation6], 1
    %20 = vsyncpa %s19, 0
    loop: start=0, step=1, limit=4
    $region2: #{tpu_custom_call.1} parent=1 // loop_pre_header
      _
    $region3: #{tpu_custom_call.1} parent=1 // loop_header
      %s22 = sphi 0, %s26
      %p23 = scmp.ge.s32.totalorder %s22, 4
      %s32 = sphi 0, %s34
      %s35 = sphi 0, %s32
      %s36 = sphi 0, %s35
      %s52 = sphi 0, %s36
      %s58 = sphi 0, %s60
      %s61 = sphi 0, %s58
      %s62 = sphi 0, %s61
      %s78 = sphi 0, %s62
      %s82 = sphi 0, %s82
      %s84 = sphi 0, %s82
      %s85 = sphi 0, %s84
      %s99 = sphi 0, %s85
      %s103 = sphi 0, %s103
      %s105 = sphi 0, %s103
      %s106 = sphi 0, %s105
      %s120 = sphi 0, %s106
      %s124 = sphi 0, %s124
      %s126 = sphi 0, %s124
      %s127 = sphi 0, %s126
      %s141 = sphi 0, %s127
      %s145 = sphi 0, %s145
      %s147 = sphi 0, %s145
      %s148 = sphi 0, %s147
      %s162 = sphi 0, %s148
      %s168 = sphi 0, %s170
      %s171 = sphi 0, %s168
      %s172 = sphi 0, %s171
      %s188 = sphi 0, %s172
    $region4: #{tpu_custom_call.1} parent=1 // loop_header_branch
      %25 = sbr.rel (%p23) target = $region8
    $region5: #{tpu_custom_call.1} parent=1 // loop_body
      %s27 = ssub.s32 %s22, 1
      %s28 = ssub.s32 %s22, 2
      %s29 = sadd.s32 %s22, 1
      %s30 = ssub.s32 %s22, %s29
      %p31 = scmp.eq.s32.totalorder %s30, 0
      %s33 = sadd.s32 %s32, 1
      %s34 = scalar_select %p31, %s32, %s33
      %p37 = pneg %p31
      %p38 = scmp.eq.s32.totalorder %s22, 1
      %p39 = por %p37, %p38
      %p40 = scmp.ne.s32.totalorder %s32, %s35
      %p41 = scmp.eq.s32.totalorder %s22, 0
      %p42 = por %p40, %p41
      %p43 = scmp.ne.s32.totalorder %s32, %s35
      %p44 = scmp.eq.s32.totalorder %s27, 1
      %p45 = por %p43, %p44
      %p46 = scmp.ne.s32.totalorder %s35, %s36
      %p47 = scmp.eq.s32.totalorder %s27, 0
      %p48 = por %p46, %p47
      %p49 = scmp.ne.s32.totalorder %s35, %s36
      %p50 = scmp.eq.s32.totalorder %s28, 1
      %p51 = por %p49, %p50
      %p53 = scmp.ne.s32.totalorder %s36, %s52
      %p54 = scmp.eq.s32.totalorder %s28, 0
      %p55 = por %p53, %p54
      %s56 = ssub.s32 %s22, %s29
      %p57 = scmp.eq.s32.totalorder %s56, 0
      %s59 = sadd.s32 %s58, 1
      %s60 = scalar_select %p57, %s58, %s59
      %p63 = pneg %p57
      %p64 = scmp.eq.s32.totalorder %s22, 1
      %p65 = por %p63, %p64
      %p66 = scmp.ne.s32.totalorder %s58, %s61
      %p67 = scmp.eq.s32.totalorder %s22, 0
      %p68 = por %p66, %p67
      %p69 = scmp.ne.s32.totalorder %s58, %s61
      %p70 = scmp.eq.s32.totalorder %s27, 1
      %p71 = por %p69, %p70
      %p72 = scmp.ne.s32.totalorder %s61, %s62
      %p73 = scmp.eq.s32.totalorder %s27, 0
      %p74 = por %p72, %p73
      %p75 = scmp.ne.s32.totalorder %s61, %s62
      %p76 = scmp.eq.s32.totalorder %s28, 1
      %p77 = por %p75, %p76
      %p79 = scmp.ne.s32.totalorder %s62, %s78
      %p80 = scmp.eq.s32.totalorder %s28, 0
      %p81 = por %p79, %p80
      %s83 = sadd.s32 %s82, 1
      %p86 = scmp.eq.s32.totalorder %s22, 1
      %p87 = scmp.ne.s32.totalorder %s82, %s84
      %p88 = scmp.eq.s32.totalorder %s22, 0
      %p89 = por %p87, %p88
      %p90 = scmp.ne.s32.totalorder %s82, %s84
      %p91 = scmp.eq.s32.totalorder %s27, 1
      %p92 = por %p90, %p91
      %p93 = scmp.ne.s32.totalorder %s84, %s85
      %p94 = scmp.eq.s32.totalorder %s27, 0
      %p95 = por %p93, %p94
      %p96 = scmp.ne.s32.totalorder %s84, %s85
      %p97 = scmp.eq.s32.totalorder %s28, 1
      %p98 = por %p96, %p97
      %p100 = scmp.ne.s32.totalorder %s85, %s99
      %p101 = scmp.eq.s32.totalorder %s28, 0
      %p102 = por %p100, %p101
      %s104 = sadd.s32 %s103, 1
      %p107 = scmp.eq.s32.totalorder %s22, 1
      %p108 = scmp.ne.s32.totalorder %s103, %s105
      %p109 = scmp.eq.s32.totalorder %s22, 0
      %p110 = por %p108, %p109
      %p111 = scmp.ne.s32.totalorder %s103, %s105
      %p112 = scmp.eq.s32.totalorder %s27, 1
      %p113 = por %p111, %p112
      %p114 = scmp.ne.s32.totalorder %s105, %s106
      %p115 = scmp.eq.s32.totalorder %s27, 0
      %p116 = por %p114, %p115
      %p117 = scmp.ne.s32.totalorder %s105, %s106
      %p118 = scmp.eq.s32.totalorder %s28, 1
      %p119 = por %p117, %p118
      %p121 = scmp.ne.s32.totalorder %s106, %s120
      %p122 = scmp.eq.s32.totalorder %s28, 0
      %p123 = por %p121, %p122
      %s125 = sadd.s32 %s124, 1
      %p128 = scmp.eq.s32.totalorder %s22, 1
      %p129 = scmp.ne.s32.totalorder %s124, %s126
      %p130 = scmp.eq.s32.totalorder %s22, 0
      %p131 = por %p129, %p130
      %p132 = scmp.ne.s32.totalorder %s124, %s126
      %p133 = scmp.eq.s32.totalorder %s27, 1
      %p134 = por %p132, %p133
      %p135 = scmp.ne.s32.totalorder %s126, %s127
      %p136 = scmp.eq.s32.totalorder %s27, 0
      %p137 = por %p135, %p136
      %p138 = scmp.ne.s32.totalorder %s126, %s127
      %p139 = scmp.eq.s32.totalorder %s28, 1
      %p140 = por %p138, %p139
      %p142 = scmp.ne.s32.totalorder %s127, %s141
      %p143 = scmp.eq.s32.totalorder %s28, 0
      %p144 = por %p142, %p143
      %s146 = sadd.s32 %s145, 1
      %p149 = scmp.eq.s32.totalorder %s22, 1
      %p150 = scmp.ne.s32.totalorder %s145, %s147
      %p151 = scmp.eq.s32.totalorder %s22, 0
      %p152 = por %p150, %p151
      %p153 = scmp.ne.s32.totalorder %s145, %s147
      %p154 = scmp.eq.s32.totalorder %s27, 1
      %p155 = por %p153, %p154
      %p156 = scmp.ne.s32.totalorder %s147, %s148
      %p157 = scmp.eq.s32.totalorder %s27, 0
      %p158 = por %p156, %p157
      %p159 = scmp.ne.s32.totalorder %s147, %s148
      %p160 = scmp.eq.s32.totalorder %s28, 1
      %p161 = por %p159, %p160
      %p163 = scmp.ne.s32.totalorder %s148, %s162
      %p164 = scmp.eq.s32.totalorder %s28, 0
      %p165 = por %p163, %p164
      %s166 = ssub.s32 %s22, %s29
      %p167 = scmp.eq.s32.totalorder %s166, 0
      %s169 = sadd.s32 %s168, 1
      %s170 = scalar_select %p167, %s168, %s169
      %p173 = pneg %p167
      %p174 = scmp.eq.s32.totalorder %s22, 1
      %p175 = por %p173, %p174
      %p176 = scmp.ne.s32.totalorder %s168, %s171
      %p177 = scmp.eq.s32.totalorder %s22, 0
      %p178 = por %p176, %p177
      %p179 = scmp.ne.s32.totalorder %s168, %s171
      %p180 = scmp.eq.s32.totalorder %s27, 1
      %p181 = por %p179, %p180
      %p182 = scmp.ne.s32.totalorder %s171, %s172
      %p183 = scmp.eq.s32.totalorder %s27, 0
      %p184 = por %p182, %p183
      %p185 = scmp.ne.s32.totalorder %s171, %s172
      %p186 = scmp.eq.s32.totalorder %s28, 1
      %p187 = por %p185, %p186
      %p189 = scmp.ne.s32.totalorder %s172, %s188
      %p190 = scmp.eq.s32.totalorder %s28, 0
      %p191 = por %p189, %p190
      %p192 = scmp.le.s32.totalorder 1, %s22
      %p193 = scmp.lt.s32.totalorder %s22, 3
      %p194 = pnand %p192, %p193
      %p195 = pneg %p194
      // Predicated region
      $region9: #{tpu_custom_call.1} parent=5 // pred_check
        _
      $region10: #{tpu_custom_call.1} parent=5 // pred_check_branch
        %197 = sbr.rel (%p194) target = $region12
      $region11: #{tpu_custom_call.1} parent=5 // pred_region
        %s198 = ssub.s32 %s22, 1
        // Predicated region
        $region13: #{tpu_custom_call.1} parent=11 // pred_check
          %p199 = pneg %p95
        $region14: #{tpu_custom_call.1} parent=11 // pred_check_branch
          %201 = sbr.rel (%p199) target = $region16
        $region15: #{tpu_custom_call.1} parent=11 // pred_region
          _
        $region16: #{tpu_custom_call.1} parent=11 // pred_fallthru
          _
        // Predicated region
        $region17: #{tpu_custom_call.1} parent=11 // pred_check
          %p202 = pneg %p116
        $region18: #{tpu_custom_call.1} parent=11 // pred_check_branch
          %204 = sbr.rel (%p202) target = $region20
        $region19: #{tpu_custom_call.1} parent=11 // pred_region
          _
        $region20: #{tpu_custom_call.1} parent=11 // pred_fallthru
          _
        // Predicated region
        $region21: #{tpu_custom_call.1} parent=11 // pred_check
          %p205 = pneg %p137
        $region22: #{tpu_custom_call.1} parent=11 // pred_check_branch
          %207 = sbr.rel (%p205) target = $region24
        $region23: #{tpu_custom_call.1} parent=11 // pred_region
          %s209 = ssub.s32 256, 256
          %210 = vsyncadd [#allocation9], %s209
          %s212 = sshll.u32 [#allocation10], 4
          %s213 = int_to_ptr.vmem [resolvable:$true] %s212
          %215 = dma.hbm_to_vmem [thread:$0]  %s4, 256, %s213, [#allocation9]
        $region24: #{tpu_custom_call.1} parent=11 // pred_fallthru
          _
        // Predicated region
        $region25: #{tpu_custom_call.1} parent=11 // pred_check
          %p216 = pneg %p158
        $region26: #{tpu_custom_call.1} parent=11 // pred_check_branch
          %218 = sbr.rel (%p216) target = $region28
        $region27: #{tpu_custom_call.1} parent=11 // pred_region
          %s220 = ssub.s32 16, 16
          %221 = vsyncadd [#allocation7], %s220
          %s223 = sshll.u32 %s5, 4
          %s224 = int_to_ptr.vmem [resolvable:$true] %s223
          %226 = dma.vmem_to_smem %s224, 16, [#allocation11], [#allocation7]
        $region28: #{tpu_custom_call.1} parent=11 // pred_fallthru
          _
      $region12: #{tpu_custom_call.1} parent=5 // pred_fallthru
        _
      %p227 = scmp.lt.s32.totalorder %s22, 2
      // Predicated region
      $region29: #{tpu_custom_call.1} parent=5 // pred_check
        %p228 = pneg %p227
      $region30: #{tpu_custom_call.1} parent=5 // pred_check_branch
        %230 = sbr.rel (%p228) target = $region32
      $region31: #{tpu_custom_call.1} parent=5 // pred_region
        // Predicated region
        $region33: #{tpu_custom_call.1} parent=31 // pred_check
          %p231 = pneg %p42
        $region34: #{tpu_custom_call.1} parent=31 // pred_check_branch
          %233 = sbr.rel (%p231) target = $region36
        $region35: #{tpu_custom_call.1} parent=31 // pred_region
          %s234 = sand.u32 %s32, 1
          %s235 = scalar_lea.sflag [#allocation5], %s234
          %s236 = sand.u32 %s32, 1
          %s237 = smul.addr %s236, 64
          %s238 = scalar_lea.vmem [#allocation4], %s237
          %s240 = ssub.s32 1024, 1024
          %241 = vsyncadd %s235, %s240
          %s242 = smul.addr %s22, 8
          %s243 = smul.addr %s242, 128
          %s244 = scalar_lea.hbm %s0, %s243
          %s245 = sshll.u32 %s238, 4
          %s246 = int_to_ptr.vmem [resolvable:$true] %s245
          %251 = dma.hbm_to_vmem [thread:$0]  %s244, 1024, %s246, %s235, 256, 256, 16
        $region36: #{tpu_custom_call.1} parent=31 // pred_fallthru
          _
        // Predicated region
        $region37: #{tpu_custom_call.1} parent=31 // pred_check
          %p252 = pneg %p68
        $region38: #{tpu_custom_call.1} parent=31 // pred_check_branch
          %254 = sbr.rel (%p252) target = $region40
        $region39: #{tpu_custom_call.1} parent=31 // pred_region
          %s255 = sand.u32 %s22, 1
          %s256 = scalar_lea.sflag [#allocation9], %s255
          %s257 = sand.u32 %s58, 1
          %s258 = smul.addr %s257, 64
          %s259 = scalar_lea.vmem [#allocation8], %s258
          %s261 = ssub.s32 1024, 1024
          %262 = vsyncadd %s256, %s261
          %s263 = smul.addr %s22, 8
          %s264 = smul.addr %s263, 128
          %s265 = scalar_lea.hbm %s1, %s264
          %s266 = sshll.u32 %s259, 4
          %s267 = int_to_ptr.vmem [resolvable:$true] %s266
          %272 = dma.hbm_to_vmem [thread:$0]  %s265, 1024, %s267, %s256, 256, 256, 16
        $region40: #{tpu_custom_call.1} parent=31 // pred_fallthru
          _
      $region32: #{tpu_custom_call.1} parent=5 // pred_fallthru
        _
      %p273 = scmp.le.s32.totalorder 1, %s22
      %p274 = scmp.lt.s32.totalorder %s22, 3
      %p275 = pnand %p273, %p274
      %p276 = pneg %p275
      // Predicated region
      $region41: #{tpu_custom_call.1} parent=5 // pred_check
        _
      $region42: #{tpu_custom_call.1} parent=5 // pred_check_branch
        %278 = sbr.rel (%p275) target = $region44
      $region43: #{tpu_custom_call.1} parent=5 // pred_region
        %s279 = ssub.s32 %s22, 1
        %s280 = sand.u32 %s35, 1
        %s281 = scalar_lea.sflag [#allocation5], %s280
        %s282 = sand.u32 %s35, 1
        %s283 = smul.addr %s282, 64
        %s284 = scalar_lea.vmem [#allocation4], %s283
        // Predicated region
        $region45: #{tpu_custom_call.1} parent=43 // pred_check
          %p285 = pneg %p48
        $region46: #{tpu_custom_call.1} parent=43 // pred_check_branch
          %287 = sbr.rel (%p285) target = $region48
        $region47: #{tpu_custom_call.1} parent=43 // pred_region
          %288 = dma.done %s281, 1024
        $region48: #{tpu_custom_call.1} parent=43 // pred_fallthru
          _
        %s289 = sand.u32 %s27, 1
        %s290 = scalar_lea.sflag [#allocation9], %s289
        %s291 = sand.u32 %s61, 1
        %s292 = smul.addr %s291, 64
        %s293 = scalar_lea.vmem [#allocation8], %s292
        // Predicated region
        $region49: #{tpu_custom_call.1} parent=43 // pred_check
          %p294 = pneg %p74
        $region50: #{tpu_custom_call.1} parent=43 // pred_check_branch
          %296 = sbr.rel (%p294) target = $region52
        $region51: #{tpu_custom_call.1} parent=43 // pred_region
          %297 = dma.done %s290, 1024
        $region52: #{tpu_custom_call.1} parent=43 // pred_fallthru
          _
        // Predicated region
        $region53: #{tpu_custom_call.1} parent=43 // pred_check
          %p298 = pneg %p137
        $region54: #{tpu_custom_call.1} parent=43 // pred_check_branch
          %300 = sbr.rel (%p298) target = $region56
        $region55: #{tpu_custom_call.1} parent=43 // pred_region
          %301 = dma.done [#allocation9], 256
        $region56: #{tpu_custom_call.1} parent=43 // pred_fallthru
          _
        // Predicated region
        $region57: #{tpu_custom_call.1} parent=43 // pred_check
          %p302 = pneg %p158
        $region58: #{tpu_custom_call.1} parent=43 // pred_check_branch
          %304 = sbr.rel (%p302) target = $region60
        $region59: #{tpu_custom_call.1} parent=43 // pred_region
          %305 = dma.done [#allocation7], 16
        $region60: #{tpu_custom_call.1} parent=43 // pred_fallthru
          _
        %306 = sfence
        %s307 = sand.u32 %s35, 1
        %s308 = scalar_lea.sflag [#allocation5], %s307
        %s309 = sand.u32 %s35, 1
        %s310 = smul.addr %s309, 64
        %s311 = scalar_lea.vmem [#allocation4], %s310
        %p312 = pneg %p48
        %p313 = pneg %p45
        %s314 = sand.u32 %s27, 1
        %s315 = scalar_lea.sflag [#allocation9], %s314
        %s316 = sand.u32 %s61, 1
        %s317 = smul.addr %s316, 64
        %s318 = scalar_lea.vmem [#allocation8], %s317
        %p319 = pneg %p74
        %p320 = pneg %p71
        %p321 = pneg %p95
        %p322 = pneg %p92
        %p323 = pneg %p116
        %p324 = pneg %p113
        %p325 = pneg %p137
        %p326 = pneg %p134
        %p327 = pneg %p158
        %p328 = pneg %p155
        %p329 = pneg %p184
        %p330 = pneg %p181
        %s331 = sand.u32 %s171, 1
        %s332 = scalar_lea.sflag [#allocation6], %s331
        %s333 = sand.u32 %s171, 1
        %s334 = smul.addr %s333, 64
        %s335 = scalar_lea.vmem [#allocation12], %s334
        %s336 = sld [smem:[#allocation11]]
        %s337 = sld [smem:[#allocation11 + $0x1]]
        %v338 = vld [vmem:[%s2] sm:$0x7]
        %v339 = vld [vmem:[%s3] sm:$0xf]
        %v340 = vld [vmem:[%s284] sm:$0xff]
        %v341 = vld [vmem:[%s284 + $0x8] sm:$0xff]
        %v342 = vld [vmem:[%s284 + $0x10] sm:$0xff]
        %v343 = vld [vmem:[%s284 + $0x18] sm:$0xff]
        %v344 = vld [vmem:[%s284 + $0x20] sm:$0xff]
        %v345 = vld [vmem:[%s284 + $0x28] sm:$0xff]
        %v346 = vld [vmem:[%s284 + $0x30] sm:$0xff]
        %v347 = vld [vmem:[%s284 + $0x38] sm:$0xff]
        %v348 = vld [vmem:[%s293] sm:$0xff]
        %v349 = vld [vmem:[%s293 + $0x8] sm:$0xff]
        %v350 = vld [vmem:[%s293 + $0x10] sm:$0xff]
        %v351 = vld [vmem:[%s293 + $0x18] sm:$0xff]
        %v352 = vld [vmem:[%s293 + $0x20] sm:$0xff]
        %v353 = vld [vmem:[%s293 + $0x28] sm:$0xff]
        %v354 = vld [vmem:[%s293 + $0x30] sm:$0xff]
        %v355 = vld [vmem:[%s293 + $0x38] sm:$0xff]
        %v356 = vadd.f32 %v340, %v341
        %357 = vadd.xlane.f32.xlu0 %v356
        %v358 = vpop.xlane.xlu0 %357
        %v359 = vadd.f32 %v342, %v343
        %360 = vadd.xlane.f32.xlu0 %v359
        %v361 = vpop.xlane.xlu0 %360
        %v362 = vadd.f32 %v344, %v345
        %363 = vadd.xlane.f32.xlu0 %v362
        %v364 = vpop.xlane.xlu0 %363
        %v365 = vadd.f32 %v346, %v347
        %366 = vadd.xlane.f32.xlu0 %v365
        %v367 = vpop.xlane.xlu0 %366
        %v368 = vrcp.pop 256.0
        %v369 = vmul.f32 %v358, %v368
        %v370 = vmul.f32 %v361, %v368
        %v371 = vmul.f32 %v364, %v368
        %v372 = vmul.f32 %v367, %v368
        %v373 = vmax.f32 %v340, %v341
        %374 = vmax.xlane.f32.xlu0 %v373
        %v375 = vpop.xlane.xlu0 %374
        %v376 = vmax.f32 %v342, %v343
        %377 = vmax.xlane.f32.xlu0 %v376
        %v378 = vpop.xlane.xlu0 %377
        %v379 = vmax.f32 %v344, %v345
        %380 = vmax.xlane.f32.xlu0 %v379
        %v381 = vpop.xlane.xlu0 %380
        %v382 = vmax.f32 %v346, %v347
        %383 = vmax.xlane.f32.xlu0 %v382
        %v384 = vpop.xlane.xlu0 %383
        %v385 = vadd.f32 %v348, %v349
        %386 = vadd.xlane.f32.xlu0 %v385
        %v387 = vpop.xlane.xlu0 %386
        %v388 = vadd.f32 %v350, %v351
        %389 = vadd.xlane.f32.xlu0 %v388
        %v390 = vpop.xlane.xlu0 %389
        %v391 = vadd.f32 %v352, %v353
        %392 = vadd.xlane.f32.xlu0 %v391
        %v393 = vpop.xlane.xlu0 %392
        %v394 = vadd.f32 %v354, %v355
        %395 = vadd.xlane.f32.xlu0 %v394
        %v396 = vpop.xlane.xlu0 %395
        %v397 = vmul.f32 %v387, %v368
        %v398 = vmul.f32 %v390, %v368
        %v399 = vmul.f32 %v393, %v368
        %v400 = vmul.f32 %v396, %v368
        %v401 = vmax.f32 %v348, %v349
        %402 = vmax.xlane.f32.xlu0 %v401
        %v403 = vpop.xlane.xlu0 %402
        %v404 = vmax.f32 %v350, %v351
        %405 = vmax.xlane.f32.xlu0 %v404
        %v406 = vpop.xlane.xlu0 %405
        %v407 = vmax.f32 %v352, %v353
        %408 = vmax.xlane.f32.xlu0 %v407
        %v409 = vpop.xlane.xlu0 %408
        %v410 = vmax.f32 %v354, %v355
        %411 = vmax.xlane.f32.xlu0 %v410
        %v412 = vpop.xlane.xlu0 %411
        %vm413 = vcmask 7168
        %v414 = vsel %vm413, %v369, %v375
        %v415 = vsel %vm413, %v370, %v378
        %v416 = vsel %vm413, %v371, %v381
        %v417 = vsel %vm413, %v372, %v384
        %vm418 = vcmask 15360
        %v419 = vsel %vm418, %v414, %v397
        %v420 = vsel %vm418, %v415, %v398
        %v421 = vsel %vm418, %v416, %v399
        %v422 = vsel %vm418, %v417, %v400
        %vm423 = vcmask 23552
        %v424 = vsel %vm423, %v419, %v403
        %v425 = vsel %vm423, %v420, %v406
        %v426 = vsel %vm423, %v421, %v409
        %v427 = vsel %vm423, %v422, %v412
        %vm432 = vcmask 1040384
        %v433 = vrot.slane %v424, 7
        %v434 = vrot.slane %v425, 7
        %v435 = vsel %vm432, %v433, %v434
        %v436 = vrot.slane %v426, 7
        %v437 = vsel %vm432, %v434, %v436
        %v438 = vrot.slane %v427, 7
        %v439 = vsel %vm432, %v436, %v438
        %v445 = vsel %vm432, 0.0, %v433
        %v446 = vsel %vm432, %v438, 0.0
        %vm447 = vcmask 31744
        %448 = vst.msk [vmem:[#allocation2] sm:$0xff] %vm447, %v445
        %449 = vst.msk [vmem:[#allocation2 + $0x8] sm:$0xff] %vm447, %v435
        %450 = vst.msk [vmem:[#allocation2 + $0x10] sm:$0xff] %vm447, %v437
        %451 = vst.msk [vmem:[#allocation2 + $0x18] sm:$0xff] %vm447, %v439
        %vm452 = vcmask 25600
        %453 = vst.msk [vmem:[#allocation2 + $0x20] sm:$0x3] %vm452, %v446
        %v454 = vld [vmem:[#allocation2] sm:$0xff]
        %v455 = vld [vmem:[#allocation2 + $0x8] sm:$0xff]
        %v456 = vld [vmem:[#allocation2 + $0x10] sm:$0xff]
        %v457 = vld [vmem:[#allocation2 + $0x18] sm:$0xff]
        %v458 = vlaneseq
        %v459 = vshrl.u32 %v458, 7
        %v460 = vsub.s32 0, %v459
        %v461 = vrot.slane %v338, %v460
        %v462 = vmul.f32 %v461, %v454
        %v463 = vmul.f32 %v461, %v455
        %v464 = vmul.f32 %v461, %v456
        %v465 = vmul.f32 %v461, %v457
        %v466 = vadd.f32 %v462, 0.0
        %v467 = vadd.f32 %v463, 0.0
        %v468 = vadd.f32 %v464, 0.0
        %v469 = vadd.f32 %v465, 0.0
        %v470 = vld [vmem:[#allocation2 + $0x1] sm:$0xff]
        %v471 = vld [vmem:[#allocation2 + $0x9] sm:$0xff]
        %v472 = vld [vmem:[#allocation2 + $0x11] sm:$0xff]
        %v473 = vld [vmem:[#allocation2 + $0x19] sm:$0xff]
        %v474 = vlaneseq
        %v475 = vshrl.u32 %v474, 7
        %v476 = vsub.s32 1, %v475
        %v477 = vrot.slane %v338, %v476
        %v478 = vmul.f32 %v477, %v470
        %v479 = vmul.f32 %v477, %v471
        %v480 = vmul.f32 %v477, %v472
        %v481 = vmul.f32 %v477, %v473
        %v482 = vadd.f32 %v466, %v478
        %v483 = vadd.f32 %v467, %v479
        %v484 = vadd.f32 %v468, %v480
        %v485 = vadd.f32 %v469, %v481
        %v486 = vld [vmem:[#allocation2 + $0x2] sm:$0xff]
        %v487 = vld [vmem:[#allocation2 + $0xa] sm:$0xff]
        %v488 = vld [vmem:[#allocation2 + $0x12] sm:$0xff]
        %v489 = vld [vmem:[#allocation2 + $0x1a] sm:$0xff]
        %v490 = vlaneseq
        %v491 = vshrl.u32 %v490, 7
        %v492 = vsub.s32 2, %v491
        %v493 = vrot.slane %v338, %v492
        %v494 = vmul.f32 %v493, %v486
        %v495 = vmul.f32 %v493, %v487
        %v496 = vmul.f32 %v493, %v488
        %v497 = vmul.f32 %v493, %v489
        %v498 = vadd.f32 %v482, %v494
        %v499 = vadd.f32 %v483, %v495
        %v500 = vadd.f32 %v484, %v496
        %v501 = vadd.f32 %v485, %v497
        %v502 = vsel %vm447, %v498, 0.0
        %503 = vadd.xlane.f32.xlu0 %v502
        %v504 = vpop.xlane.xlu0 %503
        %v505 = vsel %vm447, %v499, 0.0
        %506 = vadd.xlane.f32.xlu0 %v505
        %v507 = vpop.xlane.xlu0 %506
        %v508 = vsel %vm447, %v500, 0.0
        %509 = vadd.xlane.f32.xlu0 %v508
        %v510 = vpop.xlane.xlu0 %509
        %v511 = vsel %vm447, %v501, 0.0
        %512 = vadd.xlane.f32.xlu0 %v511
        %v513 = vpop.xlane.xlu0 %512
        %v514 = vstv %s336
        %v515 = vadd.f32 %v504, %v514
        %v516 = vadd.f32 %v507, %v514
        %v517 = vadd.f32 %v510, %v514
        %v518 = vadd.f32 %v513, %v514
        %v519 = vsub.f32 0.0, %v515
        %v520 = vsub.f32 0.0, %v516
        %v521 = vsub.f32 0.0, %v517
        %v522 = vsub.f32 0.0, %v518
        %v523 = vmul.f32 %v519, 1.442695
        %v524 = vpow.pop %v523
        %v525 = vmul.f32 %v520, 1.442695
        %v526 = vpow.pop %v525
        %v527 = vmul.f32 %v521, 1.442695
        %v528 = vpow.pop %v527
        %v529 = vmul.f32 %v522, 1.442695
        %v530 = vpow.pop %v529
        %v531 = vadd.f32 %v524, 1.0
        %v532 = vadd.f32 %v526, 1.0
        %v533 = vadd.f32 %v528, 1.0
        %v534 = vadd.f32 %v530, 1.0
        %v535 = vrcp.pop %v531
        %v536 = vmul.f32 1.0, %v535
        %v537 = vrcp.pop %v532
        %v538 = vmul.f32 1.0, %v537
        %v539 = vrcp.pop %v533
        %v540 = vmul.f32 1.0, %v539
        %v541 = vrcp.pop %v534
        %v542 = vmul.f32 1.0, %v541
        %v543 = vadd.f32 %v340, %v342
        %v544 = vadd.f32 %v543, %v344
        %v545 = vadd.f32 %v544, %v346
        %v546 = vrot.slane %v545, 4
        %v547 = vadd.f32 %v545, %v546
        %v548 = vrot.slane %v547, 2
        %v549 = vadd.f32 %v547, %v548
        %v550 = vrot.slane %v549, 1
        %v551 = vadd.f32 %v549, %v550
        %v552 = vadd.f32 %v341, %v343
        %v553 = vadd.f32 %v552, %v345
        %v554 = vadd.f32 %v553, %v347
        %v555 = vrot.slane %v554, 4
        %v556 = vadd.f32 %v554, %v555
        %v557 = vrot.slane %v556, 2
        %v558 = vadd.f32 %v556, %v557
        %v559 = vrot.slane %v558, 1
        %v560 = vadd.f32 %v558, %v559
        %v561 = vrcp.pop 32.0
        %v562 = vmul.f32 %v551, %v561
        %v563 = vmul.f32 %v560, %v561
        %v564 = vmax.f32 %v340, %v344
        %v565 = vmax.f32 %v342, %v346
        %v566 = vmax.f32 %v564, %v565
        %v567 = vrot.slane %v566, 4
        %v568 = vmax.f32 %v566, %v567
        %v569 = vrot.slane %v568, 2
        %v570 = vmax.f32 %v568, %v569
        %v571 = vrot.slane %v570, 1
        %v572 = vmax.f32 %v570, %v571
        %v573 = vmax.f32 %v341, %v345
        %v574 = vmax.f32 %v343, %v347
        %v575 = vmax.f32 %v573, %v574
        %v576 = vrot.slane %v575, 4
        %v577 = vmax.f32 %v575, %v576
        %v578 = vrot.slane %v577, 2
        %v579 = vmax.f32 %v577, %v578
        %v580 = vrot.slane %v579, 1
        %v581 = vmax.f32 %v579, %v580
        %v582 = vadd.f32 %v348, %v350
        %v583 = vadd.f32 %v582, %v352
        %v584 = vadd.f32 %v583, %v354
        %v585 = vrot.slane %v584, 4
        %v586 = vadd.f32 %v584, %v585
        %v587 = vrot.slane %v586, 2
        %v588 = vadd.f32 %v586, %v587
        %v589 = vrot.slane %v588, 1
        %v590 = vadd.f32 %v588, %v589
        %v591 = vadd.f32 %v349, %v351
        %v592 = vadd.f32 %v591, %v353
        %v593 = vadd.f32 %v592, %v355
        %v594 = vrot.slane %v593, 4
        %v595 = vadd.f32 %v593, %v594
        %v596 = vrot.slane %v595, 2
        %v597 = vadd.f32 %v595, %v596
        %v598 = vrot.slane %v597, 1
        %v599 = vadd.f32 %v597, %v598
        %v600 = vmul.f32 %v590, %v561
        %v601 = vmul.f32 %v599, %v561
        %v602 = vmax.f32 %v348, %v352
        %v603 = vmax.f32 %v350, %v354
        %v604 = vmax.f32 %v602, %v603
        %v605 = vrot.slane %v604, 4
        %v606 = vmax.f32 %v604, %v605
        %v607 = vrot.slane %v606, 2
        %v608 = vmax.f32 %v606, %v607
        %v609 = vrot.slane %v608, 1
        %v610 = vmax.f32 %v608, %v609
        %v611 = vmax.f32 %v349, %v353
        %v612 = vmax.f32 %v351, %v355
        %v613 = vmax.f32 %v611, %v612
        %v614 = vrot.slane %v613, 4
        %v615 = vmax.f32 %v613, %v614
        %v616 = vrot.slane %v615, 2
        %v617 = vmax.f32 %v615, %v616
        %v618 = vrot.slane %v617, 1
        %v619 = vmax.f32 %v617, %v618
        %v620 = vsel %vm432, %v562, %v572
        %v621 = vsel %vm432, %v563, %v581
        %vm622 = vcmask 1041408
        %v623 = vsel %vm622, %v620, %v600
        %v624 = vsel %vm622, %v621, %v601
        %vm625 = vcmask 1042432
        %v626 = vsel %vm625, %v623, %v610
        %v627 = vsel %vm625, %v624, %v619
        %630 = vrot.lane.b32.xlu0 %v626, 51
        %v631 = vpop.permute.xlu0 %630
        %632 = vrot.lane.b32.xlu0 %v627, 51
        %v633 = vpop.permute.xlu0 %632
        %vm634 = vcmask 416768
        %v635 = vsel %vm634, %v631, %v633
        %v638 = vsel %vm634, 0.0, %v631
        %v639 = vsel %vm634, %v633, 0.0
        %v641 = vcombine.low %v638, %v635
        %643 = vst [vmem:[#allocation3] sm:$0xff] %v641
        %vm644 = vcmask 830464
        %645 = vst.msk [vmem:[#allocation3 + $0x8] sm:$0xf] %vm644, %v639
        %v646 = vld [vmem:[#allocation3] sm:$0xff]
        %648 = vset.pattern.permute.xlu0 0
        %649 = vperm.xlu0 %648, %v339
        %v650 = vpop.permute.xlu0 %649
        %v653 = vcombine.high %v646, %v646
        %v655 = vmul.f32 %v650, %v646
        %v656 = vmul.f32 %v650, %v653
        %v657 = vadd.f32 %v655, 0.0
        %v658 = vadd.f32 %v656, 0.0
        %v659 = vld [vmem:[#allocation3] sm:$0xff]
        %v660 = vld [vmem:[#allocation3 + $0x8] sm:$0xf]
        %661 = vset.pattern.permute.xlu0 7
        %662 = vperm.xlu0 %661, %v339
        %v663 = vpop.permute.xlu0 %662
        %v667 = vcombine.high %v659, %v659
        %668 = vrot.lane.b32.xlu0 %v659, 112
        %v669 = vpop.permute.xlu0 %668
        %670 = vrot.lane.b32.xlu0 %v667, 112
        %v671 = vpop.permute.xlu0 %670
        %672 = vrot.lane.b32.xlu0 %v660, 112
        %v673 = vpop.permute.xlu0 %672
        %vm674 = vcmask 916480
        %v675 = vsel %vm674, %v669, %v671
        %v676 = vsel %vm674, %v671, %v673
        %v679 = vmul.f32 %v663, %v675
        %v680 = vmul.f32 %v663, %v676
        %v681 = vadd.f32 %v657, %v679
        %v682 = vadd.f32 %v658, %v680
        %v683 = vld [vmem:[#allocation3] sm:$0xff]
        %v684 = vld [vmem:[#allocation3 + $0x8] sm:$0xf]
        %685 = vset.pattern.permute.xlu0 14
        %686 = vperm.xlu0 %685, %v339
        %v687 = vpop.permute.xlu0 %686
        %v691 = vcombine.high %v683, %v683
        %692 = vrot.lane.b32.xlu0 %v683, 96
        %v693 = vpop.permute.xlu0 %692
        %694 = vrot.lane.b32.xlu0 %v691, 96
        %v695 = vpop.permute.xlu0 %694
        %696 = vrot.lane.b32.xlu0 %v684, 96
        %v697 = vpop.permute.xlu0 %696
        %vm698 = vcmask 785408
        %v699 = vsel %vm698, %v693, %v695
        %v700 = vsel %vm698, %v695, %v697
        %v703 = vmul.f32 %v687, %v699
        %v704 = vmul.f32 %v687, %v700
        %v705 = vadd.f32 %v681, %v703
        %v706 = vadd.f32 %v682, %v704
        %v707 = vld [vmem:[#allocation3] sm:$0xff]
        %v708 = vld [vmem:[#allocation3 + $0x8] sm:$0xf]
        %709 = vset.pattern.permute.xlu0 21
        %710 = vperm.xlu0 %709, %v339
        %v711 = vpop.permute.xlu0 %710
        %v715 = vcombine.high %v707, %v707
        %716 = vrot.lane.b32.xlu0 %v707, 80
        %v717 = vpop.permute.xlu0 %716
        %718 = vrot.lane.b32.xlu0 %v715, 80
        %v719 = vpop.permute.xlu0 %718
        %720 = vrot.lane.b32.xlu0 %v708, 80
        %v721 = vpop.permute.xlu0 %720
        %vm722 = vcmask 654336
        %v723 = vsel %vm722, %v717, %v719
        %v724 = vsel %vm722, %v719, %v721
        %v727 = vmul.f32 %v711, %v723
        %v728 = vmul.f32 %v711, %v724
        %v729 = vadd.f32 %v705, %v727
        %v730 = vadd.f32 %v706, %v728
        %v731 = vld [vmem:[#allocation3] sm:$0xff]
        %v732 = vld [vmem:[#allocation3 + $0x8] sm:$0xf]
        %733 = vset.pattern.permute.xlu0 28
        %734 = vperm.xlu0 %733, %v339
        %v735 = vpop.permute.xlu0 %734
        %v739 = vcombine.high %v731, %v731
        %740 = vrot.lane.b32.xlu0 %v731, 64
        %v741 = vpop.permute.xlu0 %740
        %742 = vrot.lane.b32.xlu0 %v739, 64
        %v743 = vpop.permute.xlu0 %742
        %744 = vrot.lane.b32.xlu0 %v732, 64
        %v745 = vpop.permute.xlu0 %744
        %vm746 = vcmask 523264
        %v747 = vsel %vm746, %v741, %v743
        %v748 = vsel %vm746, %v743, %v745
        %v751 = vmul.f32 %v735, %v747
        %v752 = vmul.f32 %v735, %v748
        %v753 = vadd.f32 %v729, %v751
        %v754 = vadd.f32 %v730, %v752
        %v755 = vld [vmem:[#allocation3] sm:$0xff]
        %v756 = vld [vmem:[#allocation3 + $0x8] sm:$0xf]
        %757 = vset.pattern.permute.xlu0 35
        %758 = vperm.xlu0 %757, %v339
        %v759 = vpop.permute.xlu0 %758
        %v763 = vcombine.high %v755, %v755
        %764 = vrot.lane.b32.xlu0 %v755, 48
        %v765 = vpop.permute.xlu0 %764
        %766 = vrot.lane.b32.xlu0 %v763, 48
        %v767 = vpop.permute.xlu0 %766
        %768 = vrot.lane.b32.xlu0 %v756, 48
        %v769 = vpop.permute.xlu0 %768
        %vm770 = vcmask 392192
        %v771 = vsel %vm770, %v765, %v767
        %v772 = vsel %vm770, %v767, %v769
        %v775 = vmul.f32 %v759, %v771
        %v776 = vmul.f32 %v759, %v772
        %v777 = vadd.f32 %v753, %v775
        %v778 = vadd.f32 %v754, %v776
        %v779 = vld [vmem:[#allocation3] sm:$0xff]
        %v780 = vld [vmem:[#allocation3 + $0x8] sm:$0xf]
        %781 = vset.pattern.permute.xlu0 42
        %782 = vperm.xlu0 %781, %v339
        %v783 = vpop.permute.xlu0 %782
        %v787 = vcombine.high %v779, %v779
        %788 = vrot.lane.b32.xlu0 %v779, 32
        %v789 = vpop.permute.xlu0 %788
        %790 = vrot.lane.b32.xlu0 %v787, 32
        %v791 = vpop.permute.xlu0 %790
        %792 = vrot.lane.b32.xlu0 %v780, 32
        %v793 = vpop.permute.xlu0 %792
        %vm794 = vcmask 261120
        %v795 = vsel %vm794, %v789, %v791
        %v796 = vsel %vm794, %v791, %v793
        %v799 = vmul.f32 %v783, %v795
        %v800 = vmul.f32 %v783, %v796
        %v801 = vadd.f32 %v777, %v799
        %v802 = vadd.f32 %v778, %v800
        %v803 = vld [vmem:[#allocation10] ss:$8 sm:$0x3]
        %v805 = vlaneseq
        %v806 = vshrl.u32 %v805, 7
        %v807 = vsub.s32 0, %v806
        %v808 = vrot.slane %v803, %v807
        %v809 = vlaneseq
        %v810 = vshrl.u32 %v809, 7
        %v811 = vsub.s32 1, %v810
        %v812 = vrot.slane %v803, %v811
        %v815 = vmul.f32 %v801, %v808
        %v816 = vmul.f32 %v802, %v812
        %v817 = vadd.f32 %v815, 0.0
        %v818 = vadd.f32 %v816, 0.0
        %v819 = vld [vmem:[#allocation3] sm:$0xff]
        %v820 = vld [vmem:[#allocation3 + $0x8] sm:$0xf]
        %821 = vset.pattern.permute.xlu0 1
        %822 = vperm.xlu0 %821, %v339
        %v823 = vpop.permute.xlu0 %822
        %v827 = vcombine.high %v819, %v819
        %828 = vrot.lane.b32.xlu0 %v819, 127
        %v829 = vpop.permute.xlu0 %828
        %830 = vrot.lane.b32.xlu0 %v827, 127
        %v831 = vpop.permute.xlu0 %830
        %832 = vrot.lane.b32.xlu0 %v820, 127
        %v833 = vpop.permute.xlu0 %832
        %vm834 = vcmask 1039360
        %v835 = vsel %vm834, %v829, %v831
        %v836 = vsel %vm834, %v831, %v833
        %v839 = vmul.f32 %v823, %v835
        %v840 = vmul.f32 %v823, %v836
        %v841 = vadd.f32 %v839, 0.0
        %v842 = vadd.f32 %v840, 0.0
        %v843 = vld [vmem:[#allocation3] sm:$0xff]
        %v844 = vld [vmem:[#allocation3 + $0x8] sm:$0xf]
        %845 = vset.pattern.permute.xlu0 8
        %846 = vperm.xlu0 %845, %v339
        %v847 = vpop.permute.xlu0 %846
        %v851 = vcombine.high %v843, %v843
        %852 = vrot.lane.b32.xlu0 %v843, 111
        %v853 = vpop.permute.xlu0 %852
        %854 = vrot.lane.b32.xlu0 %v851, 111
        %v855 = vpop.permute.xlu0 %854
        %856 = vrot.lane.b32.xlu0 %v844, 111
        %v857 = vpop.permute.xlu0 %856
        %vm858 = vcmask 908288
        %v859 = vsel %vm858, %v853, %v855
        %v860 = vsel %vm858, %v855, %v857
        %v863 = vmul.f32 %v847, %v859
        %v864 = vmul.f32 %v847, %v860
        %v865 = vadd.f32 %v841, %v863
        %v866 = vadd.f32 %v842, %v864
        %v867 = vld [vmem:[#allocation3] sm:$0xff]
        %v868 = vld [vmem:[#allocation3 + $0x8] sm:$0xf]
        %869 = vset.pattern.permute.xlu0 15
        %870 = vperm.xlu0 %869, %v339
        %v871 = vpop.permute.xlu0 %870
        %v875 = vcombine.high %v867, %v867
        %876 = vrot.lane.b32.xlu0 %v867, 95
        %v877 = vpop.permute.xlu0 %876
        %878 = vrot.lane.b32.xlu0 %v875, 95
        %v879 = vpop.permute.xlu0 %878
        %880 = vrot.lane.b32.xlu0 %v868, 95
        %v881 = vpop.permute.xlu0 %880
        %vm882 = vcmask 777216
        %v883 = vsel %vm882, %v877, %v879
        %v884 = vsel %vm882, %v879, %v881
        %v887 = vmul.f32 %v871, %v883
        %v888 = vmul.f32 %v871, %v884
        %v889 = vadd.f32 %v865, %v887
        %v890 = vadd.f32 %v866, %v888
        %v891 = vld [vmem:[#allocation3] sm:$0xff]
        %v892 = vld [vmem:[#allocation3 + $0x8] sm:$0xf]
        %893 = vset.pattern.permute.xlu0 22
        %894 = vperm.xlu0 %893, %v339
        %v895 = vpop.permute.xlu0 %894
        %v899 = vcombine.high %v891, %v891
        %900 = vrot.lane.b32.xlu0 %v891, 79
        %v901 = vpop.permute.xlu0 %900
        %902 = vrot.lane.b32.xlu0 %v899, 79
        %v903 = vpop.permute.xlu0 %902
        %904 = vrot.lane.b32.xlu0 %v892, 79
        %v905 = vpop.permute.xlu0 %904
        %vm906 = vcmask 646144
        %v907 = vsel %vm906, %v901, %v903
        %v908 = vsel %vm906, %v903, %v905
        %v911 = vmul.f32 %v895, %v907
        %v912 = vmul.f32 %v895, %v908
        %v913 = vadd.f32 %v889, %v911
        %v914 = vadd.f32 %v890, %v912
        %v915 = vld [vmem:[#allocation3] sm:$0xff]
        %v916 = vld [vmem:[#allocation3 + $0x8] sm:$0xf]
        %917 = vset.pattern.permute.xlu0 29
        %918 = vperm.xlu0 %917, %v339
        %v919 = vpop.permute.xlu0 %918
        %v923 = vcombine.high %v915, %v915
        %924 = vrot.lane.b32.xlu0 %v915, 63
        %v925 = vpop.permute.xlu0 %924
        %926 = vrot.lane.b32.xlu0 %v923, 63
        %v927 = vpop.permute.xlu0 %926
        %928 = vrot.lane.b32.xlu0 %v916, 63
        %v929 = vpop.permute.xlu0 %928
        %vm930 = vcmask 515072
        %v931 = vsel %vm930, %v925, %v927
        %v932 = vsel %vm930, %v927, %v929
        %v935 = vmul.f32 %v919, %v931
        %v936 = vmul.f32 %v919, %v932
        %v937 = vadd.f32 %v913, %v935
        %v938 = vadd.f32 %v914, %v936
        %v939 = vld [vmem:[#allocation3] sm:$0xff]
        %v940 = vld [vmem:[#allocation3 + $0x8] sm:$0xf]
        %941 = vset.pattern.permute.xlu0 36
        %942 = vperm.xlu0 %941, %v339
        %v943 = vpop.permute.xlu0 %942
        %v947 = vcombine.high %v939, %v939
        %948 = vrot.lane.b32.xlu0 %v939, 47
        %v949 = vpop.permute.xlu0 %948
        %950 = vrot.lane.b32.xlu0 %v947, 47
        %v951 = vpop.permute.xlu0 %950
        %952 = vrot.lane.b32.xlu0 %v940, 47
        %v953 = vpop.permute.xlu0 %952
        %vm954 = vcmask 384000
        %v955 = vsel %vm954, %v949, %v951
        %v956 = vsel %vm954, %v951, %v953
        %v959 = vmul.f32 %v943, %v955
        %v960 = vmul.f32 %v943, %v956
        %v961 = vadd.f32 %v937, %v959
        %v962 = vadd.f32 %v938, %v960
        %v963 = vld [vmem:[#allocation3] sm:$0xff]
        %v964 = vld [vmem:[#allocation3 + $0x8] sm:$0xf]
        %965 = vset.pattern.permute.xlu0 43
        %966 = vperm.xlu0 %965, %v339
        %v967 = vpop.permute.xlu0 %966
        %v971 = vcombine.high %v963, %v963
        %972 = vrot.lane.b32.xlu0 %v963, 31
        %v973 = vpop.permute.xlu0 %972
        %974 = vrot.lane.b32.xlu0 %v971, 31
        %v975 = vpop.permute.xlu0 %974
        %976 = vrot.lane.b32.xlu0 %v964, 31
        %v977 = vpop.permute.xlu0 %976
        %vm978 = vcmask 252928
        %v979 = vsel %vm978, %v973, %v975
        %v980 = vsel %vm978, %v975, %v977
        %v983 = vmul.f32 %v967, %v979
        %v984 = vmul.f32 %v967, %v980
        %v985 = vadd.f32 %v961, %v983
        %v986 = vadd.f32 %v962, %v984
        %s987 = scalar_lea.vmem [#allocation10], 1
        %v988 = vld [vmem:[%s987] ss:$8 sm:$0x3]
        %v990 = vlaneseq
        %v991 = vshrl.u32 %v990, 7
        %v992 = vsub.s32 0, %v991
        %v993 = vrot.slane %v988, %v992
        %v994 = vlaneseq
        %v995 = vshrl.u32 %v994, 7
        %v996 = vsub.s32 1, %v995
        %v997 = vrot.slane %v988, %v996
        %v1000 = vmul.f32 %v985, %v993
        %v1001 = vmul.f32 %v986, %v997
        %v1002 = vadd.f32 %v817, %v1000
        %v1003 = vadd.f32 %v818, %v1001
        %v1004 = vld [vmem:[#allocation3] sm:$0xff]
        %v1005 = vld [vmem:[#allocation3 + $0x8] sm:$0xf]
        %1006 = vset.pattern.permute.xlu0 2
        %1007 = vperm.xlu0 %1006, %v339
        %v1008 = vpop.permute.xlu0 %1007
        %v1012 = vcombine.high %v1004, %v1004
        %1013 = vrot.lane.b32.xlu0 %v1004, 126
        %v1014 = vpop.permute.xlu0 %1013
        %1015 = vrot.lane.b32.xlu0 %v1012, 126
        %v1016 = vpop.permute.xlu0 %1015
        %1017 = vrot.lane.b32.xlu0 %v1005, 126
        %v1018 = vpop.permute.xlu0 %1017
        %vm1019 = vcmask 1031168
        %v1020 = vsel %vm1019, %v1014, %v1016
        %v1021 = vsel %vm1019, %v1016, %v1018
        %v1024 = vmul.f32 %v1008, %v1020
        %v1025 = vmul.f32 %v1008, %v1021
        %v1026 = vadd.f32 %v1024, 0.0
        %v1027 = vadd.f32 %v1025, 0.0
        %v1028 = vld [vmem:[#allocation3] sm:$0xff]
        %v1029 = vld [vmem:[#allocation3 + $0x8] sm:$0xf]
        %1030 = vset.pattern.permute.xlu0 9
        %1031 = vperm.xlu0 %1030, %v339
        %v1032 = vpop.permute.xlu0 %1031
        %v1036 = vcombine.high %v1028, %v1028
        %1037 = vrot.lane.b32.xlu0 %v1028, 110
        %v1038 = vpop.permute.xlu0 %1037
        %1039 = vrot.lane.b32.xlu0 %v1036, 110
        %v1040 = vpop.permute.xlu0 %1039
        %1041 = vrot.lane.b32.xlu0 %v1029, 110
        %v1042 = vpop.permute.xlu0 %1041
        %vm1043 = vcmask 900096
        %v1044 = vsel %vm1043, %v1038, %v1040
        %v1045 = vsel %vm1043, %v1040, %v1042
        %v1048 = vmul.f32 %v1032, %v1044
        %v1049 = vmul.f32 %v1032, %v1045
        %v1050 = vadd.f32 %v1026, %v1048
        %v1051 = vadd.f32 %v1027, %v1049
        %v1052 = vld [vmem:[#allocation3] sm:$0xff]
        %v1053 = vld [vmem:[#allocation3 + $0x8] sm:$0xf]
        %1054 = vset.pattern.permute.xlu0 16
        %1055 = vperm.xlu0 %1054, %v339
        %v1056 = vpop.permute.xlu0 %1055
        %v1060 = vcombine.high %v1052, %v1052
        %1061 = vrot.lane.b32.xlu0 %v1052, 94
        %v1062 = vpop.permute.xlu0 %1061
        %1063 = vrot.lane.b32.xlu0 %v1060, 94
        %v1064 = vpop.permute.xlu0 %1063
        %1065 = vrot.lane.b32.xlu0 %v1053, 94
        %v1066 = vpop.permute.xlu0 %1065
        %vm1067 = vcmask 769024
        %v1068 = vsel %vm1067, %v1062, %v1064
        %v1069 = vsel %vm1067, %v1064, %v1066
        %v1072 = vmul.f32 %v1056, %v1068
        %v1073 = vmul.f32 %v1056, %v1069
        %v1074 = vadd.f32 %v1050, %v1072
        %v1075 = vadd.f32 %v1051, %v1073
        %v1076 = vld [vmem:[#allocation3] sm:$0xff]
        %v1077 = vld [vmem:[#allocation3 + $0x8] sm:$0xf]
        %1078 = vset.pattern.permute.xlu0 23
        %1079 = vperm.xlu0 %1078, %v339
        %v1080 = vpop.permute.xlu0 %1079
        %v1084 = vcombine.high %v1076, %v1076
        %1085 = vrot.lane.b32.xlu0 %v1076, 78
        %v1086 = vpop.permute.xlu0 %1085
        %1087 = vrot.lane.b32.xlu0 %v1084, 78
        %v1088 = vpop.permute.xlu0 %1087
        %1089 = vrot.lane.b32.xlu0 %v1077, 78
        %v1090 = vpop.permute.xlu0 %1089
        %vm1091 = vcmask 637952
        %v1092 = vsel %vm1091, %v1086, %v1088
        %v1093 = vsel %vm1091, %v1088, %v1090
        %v1096 = vmul.f32 %v1080, %v1092
        %v1097 = vmul.f32 %v1080, %v1093
        %v1098 = vadd.f32 %v1074, %v1096
        %v1099 = vadd.f32 %v1075, %v1097
        %v1100 = vld [vmem:[#allocation3] sm:$0xff]
        %v1101 = vld [vmem:[#allocation3 + $0x8] sm:$0xf]
        %1102 = vset.pattern.permute.xlu0 30
        %1103 = vperm.xlu0 %1102, %v339
        %v1104 = vpop.permute.xlu0 %1103
        %v1108 = vcombine.high %v1100, %v1100
        %1109 = vrot.lane.b32.xlu0 %v1100, 62
        %v1110 = vpop.permute.xlu0 %1109
        %1111 = vrot.lane.b32.xlu0 %v1108, 62
        %v1112 = vpop.permute.xlu0 %1111
        %1113 = vrot.lane.b32.xlu0 %v1101, 62
        %v1114 = vpop.permute.xlu0 %1113
        %vm1115 = vcmask 506880
        %v1116 = vsel %vm1115, %v1110, %v1112
        %v1117 = vsel %vm1115, %v1112, %v1114
        %v1120 = vmul.f32 %v1104, %v1116
        %v1121 = vmul.f32 %v1104, %v1117
        %v1122 = vadd.f32 %v1098, %v1120
        %v1123 = vadd.f32 %v1099, %v1121
        %v1124 = vld [vmem:[#allocation3] sm:$0xff]
        %v1125 = vld [vmem:[#allocation3 + $0x8] sm:$0xf]
        %1126 = vset.pattern.permute.xlu0 37
        %1127 = vperm.xlu0 %1126, %v339
        %v1128 = vpop.permute.xlu0 %1127
        %v1132 = vcombine.high %v1124, %v1124
        %1133 = vrot.lane.b32.xlu0 %v1124, 46
        %v1134 = vpop.permute.xlu0 %1133
        %1135 = vrot.lane.b32.xlu0 %v1132, 46
        %v1136 = vpop.permute.xlu0 %1135
        %1137 = vrot.lane.b32.xlu0 %v1125, 46
        %v1138 = vpop.permute.xlu0 %1137
        %vm1139 = vcmask 375808
        %v1140 = vsel %vm1139, %v1134, %v1136
        %v1141 = vsel %vm1139, %v1136, %v1138
        %v1144 = vmul.f32 %v1128, %v1140
        %v1145 = vmul.f32 %v1128, %v1141
        %v1146 = vadd.f32 %v1122, %v1144
        %v1147 = vadd.f32 %v1123, %v1145
        %v1148 = vld [vmem:[#allocation3] sm:$0xff]
        %v1149 = vld [vmem:[#allocation3 + $0x8] sm:$0xf]
        %1150 = vset.pattern.permute.xlu0 44
        %1151 = vperm.xlu0 %1150, %v339
        %v1152 = vpop.permute.xlu0 %1151
        %v1156 = vcombine.high %v1148, %v1148
        %1157 = vrot.lane.b32.xlu0 %v1148, 30
        %v1158 = vpop.permute.xlu0 %1157
        %1159 = vrot.lane.b32.xlu0 %v1156, 30
        %v1160 = vpop.permute.xlu0 %1159
        %1161 = vrot.lane.b32.xlu0 %v1149, 30
        %v1162 = vpop.permute.xlu0 %1161
        %vm1163 = vcmask 244736
        %v1164 = vsel %vm1163, %v1158, %v1160
        %v1165 = vsel %vm1163, %v1160, %v1162
        %v1168 = vmul.f32 %v1152, %v1164
        %v1169 = vmul.f32 %v1152, %v1165
        %v1170 = vadd.f32 %v1146, %v1168
        %v1171 = vadd.f32 %v1147, %v1169
        %s1172 = scalar_lea.vmem [#allocation10], 2
        %v1173 = vld [vmem:[%s1172] ss:$8 sm:$0x3]
        %v1175 = vlaneseq
        %v1176 = vshrl.u32 %v1175, 7
        %v1177 = vsub.s32 0, %v1176
        %v1178 = vrot.slane %v1173, %v1177
        %v1179 = vlaneseq
        %v1180 = vshrl.u32 %v1179, 7
        %v1181 = vsub.s32 1, %v1180
        %v1182 = vrot.slane %v1173, %v1181
        %v1185 = vmul.f32 %v1170, %v1178
        %v1186 = vmul.f32 %v1171, %v1182
        %v1187 = vadd.f32 %v1002, %v1185
        %v1188 = vadd.f32 %v1003, %v1186
        %v1189 = vld [vmem:[#allocation3] sm:$0xff]
        %v1190 = vld [vmem:[#allocation3 + $0x8] sm:$0xf]
        %1191 = vset.pattern.permute.xlu0 3
        %1192 = vperm.xlu0 %1191, %v339
        %v1193 = vpop.permute.xlu0 %1192
        %v1197 = vcombine.high %v1189, %v1189
        %1198 = vrot.lane.b32.xlu0 %v1189, 125
        %v1199 = vpop.permute.xlu0 %1198
        %1200 = vrot.lane.b32.xlu0 %v1197, 125
        %v1201 = vpop.permute.xlu0 %1200
        %1202 = vrot.lane.b32.xlu0 %v1190, 125
        %v1203 = vpop.permute.xlu0 %1202
        %vm1204 = vcmask 1022976
        %v1205 = vsel %vm1204, %v1199, %v1201
        %v1206 = vsel %vm1204, %v1201, %v1203
        %v1209 = vmul.f32 %v1193, %v1205
        %v1210 = vmul.f32 %v1193, %v1206
        %v1211 = vadd.f32 %v1209, 0.0
        %v1212 = vadd.f32 %v1210, 0.0
        %v1213 = vld [vmem:[#allocation3] sm:$0xff]
        %v1214 = vld [vmem:[#allocation3 + $0x8] sm:$0xf]
        %1215 = vset.pattern.permute.xlu0 10
        %1216 = vperm.xlu0 %1215, %v339
        %v1217 = vpop.permute.xlu0 %1216
        %v1221 = vcombine.high %v1213, %v1213
        %1222 = vrot.lane.b32.xlu0 %v1213, 109
        %v1223 = vpop.permute.xlu0 %1222
        %1224 = vrot.lane.b32.xlu0 %v1221, 109
        %v1225 = vpop.permute.xlu0 %1224
        %1226 = vrot.lane.b32.xlu0 %v1214, 109
        %v1227 = vpop.permute.xlu0 %1226
        %vm1228 = vcmask 891904
        %v1229 = vsel %vm1228, %v1223, %v1225
        %v1230 = vsel %vm1228, %v1225, %v1227
        %v1233 = vmul.f32 %v1217, %v1229
        %v1234 = vmul.f32 %v1217, %v1230
        %v1235 = vadd.f32 %v1211, %v1233
        %v1236 = vadd.f32 %v1212, %v1234
        %v1237 = vld [vmem:[#allocation3] sm:$0xff]
        %v1238 = vld [vmem:[#allocation3 + $0x8] sm:$0xf]
        %1239 = vset.pattern.permute.xlu0 17
        %1240 = vperm.xlu0 %1239, %v339
        %v1241 = vpop.permute.xlu0 %1240
        %v1245 = vcombine.high %v1237, %v1237
        %1246 = vrot.lane.b32.xlu0 %v1237, 93
        %v1247 = vpop.permute.xlu0 %1246
        %1248 = vrot.lane.b32.xlu0 %v1245, 93
        %v1249 = vpop.permute.xlu0 %1248
        %1250 = vrot.lane.b32.xlu0 %v1238, 93
        %v1251 = vpop.permute.xlu0 %1250
        %vm1252 = vcmask 760832
        %v1253 = vsel %vm1252, %v1247, %v1249
        %v1254 = vsel %vm1252, %v1249, %v1251
        %v1257 = vmul.f32 %v1241, %v1253
        %v1258 = vmul.f32 %v1241, %v1254
        %v1259 = vadd.f32 %v1235, %v1257
        %v1260 = vadd.f32 %v1236, %v1258
        %v1261 = vld [vmem:[#allocation3] sm:$0xff]
        %v1262 = vld [vmem:[#allocation3 + $0x8] sm:$0xf]
        %1263 = vset.pattern.permute.xlu0 24
        %1264 = vperm.xlu0 %1263, %v339
        %v1265 = vpop.permute.xlu0 %1264
        %v1269 = vcombine.high %v1261, %v1261
        %1270 = vrot.lane.b32.xlu0 %v1261, 77
        %v1271 = vpop.permute.xlu0 %1270
        %1272 = vrot.lane.b32.xlu0 %v1269, 77
        %v1273 = vpop.permute.xlu0 %1272
        %1274 = vrot.lane.b32.xlu0 %v1262, 77
        %v1275 = vpop.permute.xlu0 %1274
        %vm1276 = vcmask 629760
        %v1277 = vsel %vm1276, %v1271, %v1273
        %v1278 = vsel %vm1276, %v1273, %v1275
        %v1281 = vmul.f32 %v1265, %v1277
        %v1282 = vmul.f32 %v1265, %v1278
        %v1283 = vadd.f32 %v1259, %v1281
        %v1284 = vadd.f32 %v1260, %v1282
        %v1285 = vld [vmem:[#allocation3] sm:$0xff]
        %v1286 = vld [vmem:[#allocation3 + $0x8] sm:$0xf]
        %1287 = vset.pattern.permute.xlu0 31
        %1288 = vperm.xlu0 %1287, %v339
        %v1289 = vpop.permute.xlu0 %1288
        %v1293 = vcombine.high %v1285, %v1285
        %1294 = vrot.lane.b32.xlu0 %v1285, 61
        %v1295 = vpop.permute.xlu0 %1294
        %1296 = vrot.lane.b32.xlu0 %v1293, 61
        %v1297 = vpop.permute.xlu0 %1296
        %1298 = vrot.lane.b32.xlu0 %v1286, 61
        %v1299 = vpop.permute.xlu0 %1298
        %vm1300 = vcmask 498688
        %v1301 = vsel %vm1300, %v1295, %v1297
        %v1302 = vsel %vm1300, %v1297, %v1299
        %v1305 = vmul.f32 %v1289, %v1301
        %v1306 = vmul.f32 %v1289, %v1302
        %v1307 = vadd.f32 %v1283, %v1305
        %v1308 = vadd.f32 %v1284, %v1306
        %v1309 = vld [vmem:[#allocation3] sm:$0xff]
        %v1310 = vld [vmem:[#allocation3 + $0x8] sm:$0xf]
        %1311 = vset.pattern.permute.xlu0 38
        %1312 = vperm.xlu0 %1311, %v339
        %v1313 = vpop.permute.xlu0 %1312
        %v1317 = vcombine.high %v1309, %v1309
        %1318 = vrot.lane.b32.xlu0 %v1309, 45
        %v1319 = vpop.permute.xlu0 %1318
        %1320 = vrot.lane.b32.xlu0 %v1317, 45
        %v1321 = vpop.permute.xlu0 %1320
        %1322 = vrot.lane.b32.xlu0 %v1310, 45
        %v1323 = vpop.permute.xlu0 %1322
        %vm1324 = vcmask 367616
        %v1325 = vsel %vm1324, %v1319, %v1321
        %v1326 = vsel %vm1324, %v1321, %v1323
        %v1329 = vmul.f32 %v1313, %v1325
        %v1330 = vmul.f32 %v1313, %v1326
        %v1331 = vadd.f32 %v1307, %v1329
        %v1332 = vadd.f32 %v1308, %v1330
        %v1333 = vld [vmem:[#allocation3] sm:$0xff]
        %v1334 = vld [vmem:[#allocation3 + $0x8] sm:$0xf]
        %1335 = vset.pattern.permute.xlu0 45
        %1336 = vperm.xlu0 %1335, %v339
        %v1337 = vpop.permute.xlu0 %1336
        %v1341 = vcombine.high %v1333, %v1333
        %1342 = vrot.lane.b32.xlu0 %v1333, 29
        %v1343 = vpop.permute.xlu0 %1342
        %1344 = vrot.lane.b32.xlu0 %v1341, 29
        %v1345 = vpop.permute.xlu0 %1344
        %1346 = vrot.lane.b32.xlu0 %v1334, 29
        %v1347 = vpop.permute.xlu0 %1346
        %vm1348 = vcmask 236544
        %v1349 = vsel %vm1348, %v1343, %v1345
        %v1350 = vsel %vm1348, %v1345, %v1347
        %v1353 = vmul.f32 %v1337, %v1349
        %v1354 = vmul.f32 %v1337, %v1350
        %v1355 = vadd.f32 %v1331, %v1353
        %v1356 = vadd.f32 %v1332, %v1354
        %s1357 = scalar_lea.vmem [#allocation10], 3
        %v1358 = vld [vmem:[%s1357] ss:$8 sm:$0x3]
        %v1360 = vlaneseq
        %v1361 = vshrl.u32 %v1360, 7
        %v1362 = vsub.s32 0, %v1361
        %v1363 = vrot.slane %v1358, %v1362
        %v1364 = vlaneseq
        %v1365 = vshrl.u32 %v1364, 7
        %v1366 = vsub.s32 1, %v1365
        %v1367 = vrot.slane %v1358, %v1366
        %v1370 = vmul.f32 %v1355, %v1363
        %v1371 = vmul.f32 %v1356, %v1367
        %v1372 = vadd.f32 %v1187, %v1370
        %v1373 = vadd.f32 %v1188, %v1371
        %v1374 = vld [vmem:[#allocation3] sm:$0xff]
        %v1375 = vld [vmem:[#allocation3 + $0x8] sm:$0xf]
        %1376 = vset.pattern.permute.xlu0 4
        %1377 = vperm.xlu0 %1376, %v339
        %v1378 = vpop.permute.xlu0 %1377
        %v1382 = vcombine.high %v1374, %v1374
        %1383 = vrot.lane.b32.xlu0 %v1374, 124
        %v1384 = vpop.permute.xlu0 %1383
        %1385 = vrot.lane.b32.xlu0 %v1382, 124
        %v1386 = vpop.permute.xlu0 %1385
        %1387 = vrot.lane.b32.xlu0 %v1375, 124
        %v1388 = vpop.permute.xlu0 %1387
        %vm1389 = vcmask 1014784
        %v1390 = vsel %vm1389, %v1384, %v1386
        %v1391 = vsel %vm1389, %v1386, %v1388
        %v1394 = vmul.f32 %v1378, %v1390
        %v1395 = vmul.f32 %v1378, %v1391
        %v1396 = vadd.f32 %v1394, 0.0
        %v1397 = vadd.f32 %v1395, 0.0
        %v1398 = vld [vmem:[#allocation3] sm:$0xff]
        %v1399 = vld [vmem:[#allocation3 + $0x8] sm:$0xf]
        %1400 = vset.pattern.permute.xlu0 11
        %1401 = vperm.xlu0 %1400, %v339
        %v1402 = vpop.permute.xlu0 %1401
        %v1406 = vcombine.high %v1398, %v1398
        %1407 = vrot.lane.b32.xlu0 %v1398, 108
        %v1408 = vpop.permute.xlu0 %1407
        %1409 = vrot.lane.b32.xlu0 %v1406, 108
        %v1410 = vpop.permute.xlu0 %1409
        %1411 = vrot.lane.b32.xlu0 %v1399, 108
        %v1412 = vpop.permute.xlu0 %1411
        %vm1413 = vcmask 883712
        %v1414 = vsel %vm1413, %v1408, %v1410
        %v1415 = vsel %vm1413, %v1410, %v1412
        %v1418 = vmul.f32 %v1402, %v1414
        %v1419 = vmul.f32 %v1402, %v1415
        %v1420 = vadd.f32 %v1396, %v1418
        %v1421 = vadd.f32 %v1397, %v1419
        %v1422 = vld [vmem:[#allocation3] sm:$0xff]
        %v1423 = vld [vmem:[#allocation3 + $0x8] sm:$0xf]
        %1424 = vset.pattern.permute.xlu0 18
        %1425 = vperm.xlu0 %1424, %v339
        %v1426 = vpop.permute.xlu0 %1425
        %v1430 = vcombine.high %v1422, %v1422
        %1431 = vrot.lane.b32.xlu0 %v1422, 92
        %v1432 = vpop.permute.xlu0 %1431
        %1433 = vrot.lane.b32.xlu0 %v1430, 92
        %v1434 = vpop.permute.xlu0 %1433
        %1435 = vrot.lane.b32.xlu0 %v1423, 92
        %v1436 = vpop.permute.xlu0 %1435
        %vm1437 = vcmask 752640
        %v1438 = vsel %vm1437, %v1432, %v1434
        %v1439 = vsel %vm1437, %v1434, %v1436
        %v1442 = vmul.f32 %v1426, %v1438
        %v1443 = vmul.f32 %v1426, %v1439
        %v1444 = vadd.f32 %v1420, %v1442
        %v1445 = vadd.f32 %v1421, %v1443
        %v1446 = vld [vmem:[#allocation3] sm:$0xff]
        %v1447 = vld [vmem:[#allocation3 + $0x8] sm:$0xf]
        %1448 = vset.pattern.permute.xlu0 25
        %1449 = vperm.xlu0 %1448, %v339
        %v1450 = vpop.permute.xlu0 %1449
        %v1454 = vcombine.high %v1446, %v1446
        %1455 = vrot.lane.b32.xlu0 %v1446, 76
        %v1456 = vpop.permute.xlu0 %1455
        %1457 = vrot.lane.b32.xlu0 %v1454, 76
        %v1458 = vpop.permute.xlu0 %1457
        %1459 = vrot.lane.b32.xlu0 %v1447, 76
        %v1460 = vpop.permute.xlu0 %1459
        %vm1461 = vcmask 621568
        %v1462 = vsel %vm1461, %v1456, %v1458
        %v1463 = vsel %vm1461, %v1458, %v1460
        %v1466 = vmul.f32 %v1450, %v1462
        %v1467 = vmul.f32 %v1450, %v1463
        %v1468 = vadd.f32 %v1444, %v1466
        %v1469 = vadd.f32 %v1445, %v1467
        %v1470 = vld [vmem:[#allocation3] sm:$0xff]
        %v1471 = vld [vmem:[#allocation3 + $0x8] sm:$0xf]
        %1472 = vset.pattern.permute.xlu0 32
        %1473 = vperm.xlu0 %1472, %v339
        %v1474 = vpop.permute.xlu0 %1473
        %v1478 = vcombine.high %v1470, %v1470
        %1479 = vrot.lane.b32.xlu0 %v1470, 60
        %v1480 = vpop.permute.xlu0 %1479
        %1481 = vrot.lane.b32.xlu0 %v1478, 60
        %v1482 = vpop.permute.xlu0 %1481
        %1483 = vrot.lane.b32.xlu0 %v1471, 60
        %v1484 = vpop.permute.xlu0 %1483
        %vm1485 = vcmask 490496
        %v1486 = vsel %vm1485, %v1480, %v1482
        %v1487 = vsel %vm1485, %v1482, %v1484
        %v1490 = vmul.f32 %v1474, %v1486
        %v1491 = vmul.f32 %v1474, %v1487
        %v1492 = vadd.f32 %v1468, %v1490
        %v1493 = vadd.f32 %v1469, %v1491
        %v1494 = vld [vmem:[#allocation3] sm:$0xff]
        %v1495 = vld [vmem:[#allocation3 + $0x8] sm:$0xf]
        %1496 = vset.pattern.permute.xlu0 39
        %1497 = vperm.xlu0 %1496, %v339
        %v1498 = vpop.permute.xlu0 %1497
        %v1502 = vcombine.high %v1494, %v1494
        %1503 = vrot.lane.b32.xlu0 %v1494, 44
        %v1504 = vpop.permute.xlu0 %1503
        %1505 = vrot.lane.b32.xlu0 %v1502, 44
        %v1506 = vpop.permute.xlu0 %1505
        %1507 = vrot.lane.b32.xlu0 %v1495, 44
        %v1508 = vpop.permute.xlu0 %1507
        %vm1509 = vcmask 359424
        %v1510 = vsel %vm1509, %v1504, %v1506
        %v1511 = vsel %vm1509, %v1506, %v1508
        %v1514 = vmul.f32 %v1498, %v1510
        %v1515 = vmul.f32 %v1498, %v1511
        %v1516 = vadd.f32 %v1492, %v1514
        %v1517 = vadd.f32 %v1493, %v1515
        %v1518 = vld [vmem:[#allocation3] sm:$0xff]
        %v1519 = vld [vmem:[#allocation3 + $0x8] sm:$0xf]
        %1520 = vset.pattern.permute.xlu0 46
        %1521 = vperm.xlu0 %1520, %v339
        %v1522 = vpop.permute.xlu0 %1521
        %v1526 = vcombine.high %v1518, %v1518
        %1527 = vrot.lane.b32.xlu0 %v1518, 28
        %v1528 = vpop.permute.xlu0 %1527
        %1529 = vrot.lane.b32.xlu0 %v1526, 28
        %v1530 = vpop.permute.xlu0 %1529
        %1531 = vrot.lane.b32.xlu0 %v1519, 28
        %v1532 = vpop.permute.xlu0 %1531
        %vm1533 = vcmask 228352
        %v1534 = vsel %vm1533, %v1528, %v1530
        %v1535 = vsel %vm1533, %v1530, %v1532
        %v1538 = vmul.f32 %v1522, %v1534
        %v1539 = vmul.f32 %v1522, %v1535
        %v1540 = vadd.f32 %v1516, %v1538
        %v1541 = vadd.f32 %v1517, %v1539
        %s1542 = scalar_lea.vmem [#allocation10], 4
        %v1543 = vld [vmem:[%s1542] ss:$8 sm:$0x3]
        %v1545 = vlaneseq
        %v1546 = vshrl.u32 %v1545, 7
        %v1547 = vsub.s32 0, %v1546
        %v1548 = vrot.slane %v1543, %v1547
        %v1549 = vlaneseq
        %v1550 = vshrl.u32 %v1549, 7
        %v1551 = vsub.s32 1, %v1550
        %v1552 = vrot.slane %v1543, %v1551
        %v1555 = vmul.f32 %v1540, %v1548
        %v1556 = vmul.f32 %v1541, %v1552
        %v1557 = vadd.f32 %v1372, %v1555
        %v1558 = vadd.f32 %v1373, %v1556
        %v1559 = vld [vmem:[#allocation3] sm:$0xff]
        %v1560 = vld [vmem:[#allocation3 + $0x8] sm:$0xf]
        %1561 = vset.pattern.permute.xlu0 5
        %1562 = vperm.xlu0 %1561, %v339
        %v1563 = vpop.permute.xlu0 %1562
        %v1567 = vcombine.high %v1559, %v1559
        %1568 = vrot.lane.b32.xlu0 %v1559, 123
        %v1569 = vpop.permute.xlu0 %1568
        %1570 = vrot.lane.b32.xlu0 %v1567, 123
        %v1571 = vpop.permute.xlu0 %1570
        %1572 = vrot.lane.b32.xlu0 %v1560, 123
        %v1573 = vpop.permute.xlu0 %1572
        %vm1574 = vcmask 1006592
        %v1575 = vsel %vm1574, %v1569, %v1571
        %v1576 = vsel %vm1574, %v1571, %v1573
        %v1579 = vmul.f32 %v1563, %v1575
        %v1580 = vmul.f32 %v1563, %v1576
        %v1581 = vadd.f32 %v1579, 0.0
        %v1582 = vadd.f32 %v1580, 0.0
        %v1583 = vld [vmem:[#allocation3] sm:$0xff]
        %v1584 = vld [vmem:[#allocation3 + $0x8] sm:$0xf]
        %1585 = vset.pattern.permute.xlu0 12
        %1586 = vperm.xlu0 %1585, %v339
        %v1587 = vpop.permute.xlu0 %1586
        %v1591 = vcombine.high %v1583, %v1583
        %1592 = vrot.lane.b32.xlu0 %v1583, 107
        %v1593 = vpop.permute.xlu0 %1592
        %1594 = vrot.lane.b32.xlu0 %v1591, 107
        %v1595 = vpop.permute.xlu0 %1594
        %1596 = vrot.lane.b32.xlu0 %v1584, 107
        %v1597 = vpop.permute.xlu0 %1596
        %vm1598 = vcmask 875520
        %v1599 = vsel %vm1598, %v1593, %v1595
        %v1600 = vsel %vm1598, %v1595, %v1597
        %v1603 = vmul.f32 %v1587, %v1599
        %v1604 = vmul.f32 %v1587, %v1600
        %v1605 = vadd.f32 %v1581, %v1603
        %v1606 = vadd.f32 %v1582, %v1604
        %v1607 = vld [vmem:[#allocation3] sm:$0xff]
        %v1608 = vld [vmem:[#allocation3 + $0x8] sm:$0xf]
        %1609 = vset.pattern.permute.xlu0 19
        %1610 = vperm.xlu0 %1609, %v339
        %v1611 = vpop.permute.xlu0 %1610
        %v1615 = vcombine.high %v1607, %v1607
        %1616 = vrot.lane.b32.xlu0 %v1607, 91
        %v1617 = vpop.permute.xlu0 %1616
        %1618 = vrot.lane.b32.xlu0 %v1615, 91
        %v1619 = vpop.permute.xlu0 %1618
        %1620 = vrot.lane.b32.xlu0 %v1608, 91
        %v1621 = vpop.permute.xlu0 %1620
        %vm1622 = vcmask 744448
        %v1623 = vsel %vm1622, %v1617, %v1619
        %v1624 = vsel %vm1622, %v1619, %v1621
        %v1627 = vmul.f32 %v1611, %v1623
        %v1628 = vmul.f32 %v1611, %v1624
        %v1629 = vadd.f32 %v1605, %v1627
        %v1630 = vadd.f32 %v1606, %v1628
        %v1631 = vld [vmem:[#allocation3] sm:$0xff]
        %v1632 = vld [vmem:[#allocation3 + $0x8] sm:$0xf]
        %1633 = vset.pattern.permute.xlu0 26
        %1634 = vperm.xlu0 %1633, %v339
        %v1635 = vpop.permute.xlu0 %1634
        %v1639 = vcombine.high %v1631, %v1631
        %1640 = vrot.lane.b32.xlu0 %v1631, 75
        %v1641 = vpop.permute.xlu0 %1640
        %1642 = vrot.lane.b32.xlu0 %v1639, 75
        %v1643 = vpop.permute.xlu0 %1642
        %1644 = vrot.lane.b32.xlu0 %v1632, 75
        %v1645 = vpop.permute.xlu0 %1644
        %vm1646 = vcmask 613376
        %v1647 = vsel %vm1646, %v1641, %v1643
        %v1648 = vsel %vm1646, %v1643, %v1645
        %v1651 = vmul.f32 %v1635, %v1647
        %v1652 = vmul.f32 %v1635, %v1648
        %v1653 = vadd.f32 %v1629, %v1651
        %v1654 = vadd.f32 %v1630, %v1652
        %v1655 = vld [vmem:[#allocation3] sm:$0xff]
        %v1656 = vld [vmem:[#allocation3 + $0x8] sm:$0xf]
        %1657 = vset.pattern.permute.xlu0 33
        %1658 = vperm.xlu0 %1657, %v339
        %v1659 = vpop.permute.xlu0 %1658
        %v1663 = vcombine.high %v1655, %v1655
        %1664 = vrot.lane.b32.xlu0 %v1655, 59
        %v1665 = vpop.permute.xlu0 %1664
        %1666 = vrot.lane.b32.xlu0 %v1663, 59
        %v1667 = vpop.permute.xlu0 %1666
        %1668 = vrot.lane.b32.xlu0 %v1656, 59
        %v1669 = vpop.permute.xlu0 %1668
        %vm1670 = vcmask 482304
        %v1671 = vsel %vm1670, %v1665, %v1667
        %v1672 = vsel %vm1670, %v1667, %v1669
        %v1675 = vmul.f32 %v1659, %v1671
        %v1676 = vmul.f32 %v1659, %v1672
        %v1677 = vadd.f32 %v1653, %v1675
        %v1678 = vadd.f32 %v1654, %v1676
        %v1679 = vld [vmem:[#allocation3] sm:$0xff]
        %v1680 = vld [vmem:[#allocation3 + $0x8] sm:$0xf]
        %1681 = vset.pattern.permute.xlu0 40
        %1682 = vperm.xlu0 %1681, %v339
        %v1683 = vpop.permute.xlu0 %1682
        %v1687 = vcombine.high %v1679, %v1679
        %1688 = vrot.lane.b32.xlu0 %v1679, 43
        %v1689 = vpop.permute.xlu0 %1688
        %1690 = vrot.lane.b32.xlu0 %v1687, 43
        %v1691 = vpop.permute.xlu0 %1690
        %1692 = vrot.lane.b32.xlu0 %v1680, 43
        %v1693 = vpop.permute.xlu0 %1692
        %vm1694 = vcmask 351232
        %v1695 = vsel %vm1694, %v1689, %v1691
        %v1696 = vsel %vm1694, %v1691, %v1693
        %v1699 = vmul.f32 %v1683, %v1695
        %v1700 = vmul.f32 %v1683, %v1696
        %v1701 = vadd.f32 %v1677, %v1699
        %v1702 = vadd.f32 %v1678, %v1700
        %v1703 = vld [vmem:[#allocation3] sm:$0xff]
        %v1704 = vld [vmem:[#allocation3 + $0x8] sm:$0xf]
        %1705 = vset.pattern.permute.xlu0 47
        %1706 = vperm.xlu0 %1705, %v339
        %v1707 = vpop.permute.xlu0 %1706
        %v1711 = vcombine.high %v1703, %v1703
        %1712 = vrot.lane.b32.xlu0 %v1703, 27
        %v1713 = vpop.permute.xlu0 %1712
        %1714 = vrot.lane.b32.xlu0 %v1711, 27
        %v1715 = vpop.permute.xlu0 %1714
        %1716 = vrot.lane.b32.xlu0 %v1704, 27
        %v1717 = vpop.permute.xlu0 %1716
        %vm1718 = vcmask 220160
        %v1719 = vsel %vm1718, %v1713, %v1715
        %v1720 = vsel %vm1718, %v1715, %v1717
        %v1723 = vmul.f32 %v1707, %v1719
        %v1724 = vmul.f32 %v1707, %v1720
        %v1725 = vadd.f32 %v1701, %v1723
        %v1726 = vadd.f32 %v1702, %v1724
        %s1727 = scalar_lea.vmem [#allocation10], 5
        %v1728 = vld [vmem:[%s1727] ss:$8 sm:$0x3]
        %v1730 = vlaneseq
        %v1731 = vshrl.u32 %v1730, 7
        %v1732 = vsub.s32 0, %v1731
        %v1733 = vrot.slane %v1728, %v1732
        %v1734 = vlaneseq
        %v1735 = vshrl.u32 %v1734, 7
        %v1736 = vsub.s32 1, %v1735
        %v1737 = vrot.slane %v1728, %v1736
        %v1740 = vmul.f32 %v1725, %v1733
        %v1741 = vmul.f32 %v1726, %v1737
        %v1742 = vadd.f32 %v1557, %v1740
        %v1743 = vadd.f32 %v1558, %v1741
        %v1744 = vld [vmem:[#allocation3] sm:$0xff]
        %v1745 = vld [vmem:[#allocation3 + $0x8] sm:$0xf]
        %1746 = vset.pattern.permute.xlu0 6
        %1747 = vperm.xlu0 %1746, %v339
        %v1748 = vpop.permute.xlu0 %1747
        %v1752 = vcombine.high %v1744, %v1744
        %1753 = vrot.lane.b32.xlu0 %v1744, 122
        %v1754 = vpop.permute.xlu0 %1753
        %1755 = vrot.lane.b32.xlu0 %v1752, 122
        %v1756 = vpop.permute.xlu0 %1755
        %1757 = vrot.lane.b32.xlu0 %v1745, 122
        %v1758 = vpop.permute.xlu0 %1757
        %vm1759 = vcmask 998400
        %v1760 = vsel %vm1759, %v1754, %v1756
        %v1761 = vsel %vm1759, %v1756, %v1758
        %v1764 = vmul.f32 %v1748, %v1760
        %v1765 = vmul.f32 %v1748, %v1761
        %v1766 = vadd.f32 %v1764, 0.0
        %v1767 = vadd.f32 %v1765, 0.0
        %v1768 = vld [vmem:[#allocation3] sm:$0xff]
        %v1769 = vld [vmem:[#allocation3 + $0x8] sm:$0xf]
        %1770 = vset.pattern.permute.xlu0 13
        %1771 = vperm.xlu0 %1770, %v339
        %v1772 = vpop.permute.xlu0 %1771
        %v1776 = vcombine.high %v1768, %v1768
        %1777 = vrot.lane.b32.xlu0 %v1768, 106
        %v1778 = vpop.permute.xlu0 %1777
        %1779 = vrot.lane.b32.xlu0 %v1776, 106
        %v1780 = vpop.permute.xlu0 %1779
        %1781 = vrot.lane.b32.xlu0 %v1769, 106
        %v1782 = vpop.permute.xlu0 %1781
        %vm1783 = vcmask 867328
        %v1784 = vsel %vm1783, %v1778, %v1780
        %v1785 = vsel %vm1783, %v1780, %v1782
        %v1788 = vmul.f32 %v1772, %v1784
        %v1789 = vmul.f32 %v1772, %v1785
        %v1790 = vadd.f32 %v1766, %v1788
        %v1791 = vadd.f32 %v1767, %v1789
        %v1792 = vld [vmem:[#allocation3] sm:$0xff]
        %v1793 = vld [vmem:[#allocation3 + $0x8] sm:$0xf]
        %1794 = vset.pattern.permute.xlu0 20
        %1795 = vperm.xlu0 %1794, %v339
        %v1796 = vpop.permute.xlu0 %1795
        %v1800 = vcombine.high %v1792, %v1792
        %1801 = vrot.lane.b32.xlu0 %v1792, 90
        %v1802 = vpop.permute.xlu0 %1801
        %1803 = vrot.lane.b32.xlu0 %v1800, 90
        %v1804 = vpop.permute.xlu0 %1803
        %1805 = vrot.lane.b32.xlu0 %v1793, 90
        %v1806 = vpop.permute.xlu0 %1805
        %vm1807 = vcmask 736256
        %v1808 = vsel %vm1807, %v1802, %v1804
        %v1809 = vsel %vm1807, %v1804, %v1806
        %v1812 = vmul.f32 %v1796, %v1808
        %v1813 = vmul.f32 %v1796, %v1809
        %v1814 = vadd.f32 %v1790, %v1812
        %v1815 = vadd.f32 %v1791, %v1813
        %v1816 = vld [vmem:[#allocation3] sm:$0xff]
        %v1817 = vld [vmem:[#allocation3 + $0x8] sm:$0xf]
        %1818 = vset.pattern.permute.xlu0 27
        %1819 = vperm.xlu0 %1818, %v339
        %v1820 = vpop.permute.xlu0 %1819
        %v1824 = vcombine.high %v1816, %v1816
        %1825 = vrot.lane.b32.xlu0 %v1816, 74
        %v1826 = vpop.permute.xlu0 %1825
        %1827 = vrot.lane.b32.xlu0 %v1824, 74
        %v1828 = vpop.permute.xlu0 %1827
        %1829 = vrot.lane.b32.xlu0 %v1817, 74
        %v1830 = vpop.permute.xlu0 %1829
        %vm1831 = vcmask 605184
        %v1832 = vsel %vm1831, %v1826, %v1828
        %v1833 = vsel %vm1831, %v1828, %v1830
        %v1836 = vmul.f32 %v1820, %v1832
        %v1837 = vmul.f32 %v1820, %v1833
        %v1838 = vadd.f32 %v1814, %v1836
        %v1839 = vadd.f32 %v1815, %v1837
        %v1840 = vld [vmem:[#allocation3] sm:$0xff]
        %v1841 = vld [vmem:[#allocation3 + $0x8] sm:$0xf]
        %1842 = vset.pattern.permute.xlu0 34
        %1843 = vperm.xlu0 %1842, %v339
        %v1844 = vpop.permute.xlu0 %1843
        %v1848 = vcombine.high %v1840, %v1840
        %1849 = vrot.lane.b32.xlu0 %v1840, 58
        %v1850 = vpop.permute.xlu0 %1849
        %1851 = vrot.lane.b32.xlu0 %v1848, 58
        %v1852 = vpop.permute.xlu0 %1851
        %1853 = vrot.lane.b32.xlu0 %v1841, 58
        %v1854 = vpop.permute.xlu0 %1853
        %vm1855 = vcmask 474112
        %v1856 = vsel %vm1855, %v1850, %v1852
        %v1857 = vsel %vm1855, %v1852, %v1854
        %v1860 = vmul.f32 %v1844, %v1856
        %v1861 = vmul.f32 %v1844, %v1857
        %v1862 = vadd.f32 %v1838, %v1860
        %v1863 = vadd.f32 %v1839, %v1861
        %v1864 = vld [vmem:[#allocation3] sm:$0xff]
        %v1865 = vld [vmem:[#allocation3 + $0x8] sm:$0xf]
        %1866 = vset.pattern.permute.xlu0 41
        %1867 = vperm.xlu0 %1866, %v339
        %v1868 = vpop.permute.xlu0 %1867
        %v1872 = vcombine.high %v1864, %v1864
        %1873 = vrot.lane.b32.xlu0 %v1864, 42
        %v1874 = vpop.permute.xlu0 %1873
        %1875 = vrot.lane.b32.xlu0 %v1872, 42
        %v1876 = vpop.permute.xlu0 %1875
        %1877 = vrot.lane.b32.xlu0 %v1865, 42
        %v1878 = vpop.permute.xlu0 %1877
        %vm1879 = vcmask 343040
        %v1880 = vsel %vm1879, %v1874, %v1876
        %v1881 = vsel %vm1879, %v1876, %v1878
        %v1884 = vmul.f32 %v1868, %v1880
        %v1885 = vmul.f32 %v1868, %v1881
        %v1886 = vadd.f32 %v1862, %v1884
        %v1887 = vadd.f32 %v1863, %v1885
        %v1888 = vld [vmem:[#allocation3] sm:$0xff]
        %v1889 = vld [vmem:[#allocation3 + $0x8] sm:$0xf]
        %1890 = vset.pattern.permute.xlu0 48
        %1891 = vperm.xlu0 %1890, %v339
        %v1892 = vpop.permute.xlu0 %1891
        %v1896 = vcombine.high %v1888, %v1888
        %1897 = vrot.lane.b32.xlu0 %v1888, 26
        %v1898 = vpop.permute.xlu0 %1897
        %1899 = vrot.lane.b32.xlu0 %v1896, 26
        %v1900 = vpop.permute.xlu0 %1899
        %1901 = vrot.lane.b32.xlu0 %v1889, 26
        %v1902 = vpop.permute.xlu0 %1901
        %vm1903 = vcmask 211968
        %v1904 = vsel %vm1903, %v1898, %v1900
        %v1905 = vsel %vm1903, %v1900, %v1902
        %v1908 = vmul.f32 %v1892, %v1904
        %v1909 = vmul.f32 %v1892, %v1905
        %v1910 = vadd.f32 %v1886, %v1908
        %v1911 = vadd.f32 %v1887, %v1909
        %s1912 = scalar_lea.vmem [#allocation10], 6
        %v1913 = vld [vmem:[%s1912] ss:$8 sm:$0x3]
        %v1915 = vlaneseq
        %v1916 = vshrl.u32 %v1915, 7
        %v1917 = vsub.s32 0, %v1916
        %v1918 = vrot.slane %v1913, %v1917
        %v1919 = vlaneseq
        %v1920 = vshrl.u32 %v1919, 7
        %v1921 = vsub.s32 1, %v1920
        %v1922 = vrot.slane %v1913, %v1921
        %v1925 = vmul.f32 %v1910, %v1918
        %v1926 = vmul.f32 %v1911, %v1922
        %v1927 = vadd.f32 %v1742, %v1925
        %v1928 = vadd.f32 %v1743, %v1926
        %vm1929 = vcmask 1043456
        %v1930 = vsel %vm1929, %v1927, 0.0
        %v1931 = vrot.slane %v1930, 4
        %v1932 = vadd.f32 %v1930, %v1931
        %v1933 = vrot.slane %v1932, 2
        %v1934 = vadd.f32 %v1932, %v1933
        %v1935 = vrot.slane %v1934, 1
        %v1936 = vadd.f32 %v1934, %v1935
        %v1937 = vsel %vm1929, %v1928, 0.0
        %v1938 = vrot.slane %v1937, 4
        %v1939 = vadd.f32 %v1937, %v1938
        %v1940 = vrot.slane %v1939, 2
        %v1941 = vadd.f32 %v1939, %v1940
        %v1942 = vrot.slane %v1941, 1
        %v1943 = vadd.f32 %v1941, %v1942
        %v1944 = vstv %s337
        %v1945 = vadd.f32 %v1936, %v1944
        %v1946 = vadd.f32 %v1943, %v1944
        %v1947 = vsub.f32 0.0, %v1945
        %v1948 = vsub.f32 0.0, %v1946
        %v1949 = vmul.f32 %v1947, 1.442695
        %v1950 = vpow.pop %v1949
        %v1951 = vmul.f32 %v1948, 1.442695
        %v1952 = vpow.pop %v1951
        %v1953 = vadd.f32 %v1950, 1.0
        %v1954 = vadd.f32 %v1952, 1.0
        %v1955 = vrcp.pop %v1953
        %v1956 = vmul.f32 1.0, %v1955
        %v1957 = vrcp.pop %v1954
        %v1958 = vmul.f32 1.0, %v1957
        %v1959 = vadd.f32 %v536, %v1956
        %v1960 = vadd.f32 %v536, %v1958
        %v1961 = vadd.f32 %v538, %v1956
        %v1962 = vadd.f32 %v538, %v1958
        %v1963 = vadd.f32 %v540, %v1956
        %v1964 = vadd.f32 %v540, %v1958
        %v1965 = vadd.f32 %v542, %v1956
        %v1966 = vadd.f32 %v542, %v1958
        %v1967 = vmul.f32 %v348, 3.0
        %v1968 = vmul.f32 %v349, 3.0
        %v1969 = vmul.f32 %v350, 3.0
        %v1970 = vmul.f32 %v351, 3.0
        %v1971 = vmul.f32 %v352, 3.0
        %v1972 = vmul.f32 %v353, 3.0
        %v1973 = vmul.f32 %v354, 3.0
        %v1974 = vmul.f32 %v355, 3.0
        %v1975 = vadd.f32 %v340, %v1967
        %v1976 = vadd.f32 %v341, %v1968
        %v1977 = vadd.f32 %v342, %v1969
        %v1978 = vadd.f32 %v343, %v1970
        %v1979 = vadd.f32 %v344, %v1971
        %v1980 = vadd.f32 %v345, %v1972
        %v1981 = vadd.f32 %v346, %v1973
        %v1982 = vadd.f32 %v347, %v1974
        %v1983 = vsub.f32 %v340, %v348
        %v1984 = vsub.f32 %v341, %v349
        %v1985 = vsub.f32 %v342, %v350
        %v1986 = vsub.f32 %v343, %v351
        %v1987 = vsub.f32 %v344, %v352
        %v1988 = vsub.f32 %v345, %v353
        %v1989 = vsub.f32 %v346, %v354
        %v1990 = vsub.f32 %v347, %v355
        %v1991 = vmul.f32 %v1959, %v1983
        %v1992 = vmul.f32 %v1960, %v1984
        %v1993 = vmul.f32 %v1961, %v1985
        %v1994 = vmul.f32 %v1962, %v1986
        %v1995 = vmul.f32 %v1963, %v1987
        %v1996 = vmul.f32 %v1964, %v1988
        %v1997 = vmul.f32 %v1965, %v1989
        %v1998 = vmul.f32 %v1966, %v1990
        %v1999 = vadd.f32 %v1975, %v1991
        %v2000 = vadd.f32 %v1976, %v1992
        %v2001 = vadd.f32 %v1977, %v1993
        %v2002 = vadd.f32 %v1978, %v1994
        %v2003 = vadd.f32 %v1979, %v1995
        %v2004 = vadd.f32 %v1980, %v1996
        %v2005 = vadd.f32 %v1981, %v1997
        %v2006 = vadd.f32 %v1982, %v1998
        %2007 = vst [vmem:[%s335] sm:$0xff] %v1999
        %2008 = vst [vmem:[%s335 + $0x8] sm:$0xff] %v2000
        %2009 = vst [vmem:[%s335 + $0x10] sm:$0xff] %v2001
        %2010 = vst [vmem:[%s335 + $0x18] sm:$0xff] %v2002
        %2011 = vst [vmem:[%s335 + $0x20] sm:$0xff] %v2003
        %2012 = vst [vmem:[%s335 + $0x28] sm:$0xff] %v2004
        %2013 = vst [vmem:[%s335 + $0x30] sm:$0xff] %v2005
        %2014 = vst [vmem:[%s335 + $0x38] sm:$0xff] %v2006
        %s2015 = sand.u32 %s171, 1
        %s2016 = scalar_lea.sflag [#allocation6], %s2015
        %s2017 = sand.u32 %s171, 1
        %s2018 = smul.addr %s2017, 64
        %s2019 = scalar_lea.vmem [#allocation12], %s2018
        // Predicated region
        $region61: #{tpu_custom_call.1} parent=43 // pred_check
          %p2020 = pneg %p181
        $region62: #{tpu_custom_call.1} parent=43 // pred_check_branch
          %2022 = sbr.rel (%p2020) target = $region64
        $region63: #{tpu_custom_call.1} parent=43 // pred_region
          %s2024 = ssub.s32 1024, 1024
          %2025 = vsyncadd %s2016, %s2024
          %s2026 = smul.addr %s27, 8
          %s2027 = smul.addr %s2026, 128
          %s2028 = scalar_lea.hbm %s6, %s2027
          %s2029 = sshll.u32 %s2019, 4
          %s2030 = int_to_ptr.vmem [resolvable:$true] %s2029
          %2035 = dma.vmem_to_hbm [thread:$0]  %s2030, 1024, %s2028, %s2016, 256, 256, 16
        $region64: #{tpu_custom_call.1} parent=43 // pred_fallthru
          _
      $region44: #{tpu_custom_call.1} parent=5 // pred_fallthru
        _
      %p2036 = scmp.le.s32.totalorder 2, %s22
      // Predicated region
      $region65: #{tpu_custom_call.1} parent=5 // pred_check
        %p2037 = pneg %p2036
      $region66: #{tpu_custom_call.1} parent=5 // pred_check_branch
        %2039 = sbr.rel (%p2037) target = $region68
      $region67: #{tpu_custom_call.1} parent=5 // pred_region
        %s2040 = ssub.s32 %s22, 2
        // Predicated region
        $region69: #{tpu_custom_call.1} parent=67 // pred_check
          %p2041 = pneg %p187
        $region70: #{tpu_custom_call.1} parent=67 // pred_check_branch
          %2043 = sbr.rel (%p2041) target = $region72
        $region71: #{tpu_custom_call.1} parent=67 // pred_region
          %s2044 = sand.u32 %s172, 1
          %s2045 = scalar_lea.sflag [#allocation6], %s2044
          %s2046 = sand.u32 %s172, 1
          %s2047 = smul.addr %s2046, 64
          %s2048 = scalar_lea.vmem [#allocation12], %s2047
          %2049 = dma.done %s2045, 1024
        $region72: #{tpu_custom_call.1} parent=67 // pred_fallthru
          _
      $region68: #{tpu_custom_call.1} parent=5 // pred_fallthru
        _
    $region6: #{tpu_custom_call.1} parent=1 // loop_footer
      %s26 = sadd.s32 1, %s22
    $region7: #{tpu_custom_call.1} parent=1 // loop_footer_branch
      %21 = sbr.rel target = $region3
    $region8: #{tpu_custom_call.1} parent=1 // loop_exit
      _
    %2050 = vsyncpa [#allocation5], 1
    %s2051 = scalar_lea.sflag [#allocation5], 1
    %2052 = vsyncpa %s2051, 1
    %2053 = vsyncpa [#allocation9], 1
    %s2054 = scalar_lea.sflag [#allocation9], 1
    %2055 = vsyncpa %s2054, 1
    %2056 = vsyncpa [#allocation6], 1
    %s2057 = scalar_lea.sflag [#allocation6], 1
    %2058 = vsyncpa %s2057, 1
    %2059 = vsyncpa [#allocation7], 1
    %s2060 = scalar_lea.sflag [#allocation7], 1
    %2061 = vsyncpa %s2060, 1

</llo_original>
